<compile_context>
chip_gen: v6e
topology: v6e:2x2x1
jax: 0.10.0
libtpu: 0.0.40
codegen_flags: <defaults>
</compile_context>

<pallas_src>
import functools

import jax
import jax.numpy as jnp
from jax import lax
from jax.experimental import pallas as pl
from jax.experimental.pallas import tpu as pltpu

TAU = 2.0      # LIF membrane time constant
V_TH = 1.0     # spike threshold
EPS = 1e-5     # BatchNorm eps


def _ctebns_kernel(x_ref, w_ref, o_ref, tap_ref, *, t_steps, cin, no, shifts):
    """One grid step == one image (all T time steps).

    x_ref  : (T, 1, Cin, L)         zero-padded flattened frames (bf16), L = (H+3)*(W+2)
    w_ref  : (T, Cout_pad, 10*Cin)  folded conv*BN*p[t] weights (+bias col), bf16, resident
    o_ref  : (T, 1, Cout_pad, No)   spikes, pixels on lanes (bf16)
    tap_ref: (10*Cin, No)           VMEM scratch tap matrix for the single K=10*Cin matmul
    """
    # Bias slab (ones row, zero rows below) — constant across t, written once per image.
    bias_slab = (lax.broadcasted_iota(jnp.int32, (cin, no), 0) == 0).astype(tap_ref.dtype)
    tap_ref[9 * cin:10 * cin, :] = bias_slab

    def step(t, v):
        x = x_ref[t, 0]                                        # [Cin, L], one VMEM read
        # 3x3 conv taps = 9 static lane shifts of the flattened padded frame, packed as
        # 4-row slabs of the tap matrix (one MXU push with K=10*Cin instead of 9 pushes).
        for k, s in enumerate(shifts):
            tap_ref[k * cin:(k + 1) * cin, :] = x[:, s:s + no]
        y = jnp.dot(w_ref[t], tap_ref[...],
                    preferred_element_type=jnp.float32)        # conv + BN + p[t] + bias
        # LIF: v <- v + (y - v)/tau (tau=2 -> 0.5*(v+y)); spike = v >= v_th; hard reset to 0.
        v = 0.5 * (v + y)
        spike = v >= V_TH
        o_ref[t, 0] = spike.astype(o_ref.dtype)
        return jnp.where(spike, 0.0, v)

    # Membrane carried in vregs; halo columns (w >= W) carry garbage but are dropped later.
    v0 = jnp.zeros(o_ref.shape[2:], jnp.float32)               # (Cout_pad, No)
    lax.fori_loop(0, t_steps, step, v0, unroll=True)           # unrolled: LLO sees all t


def ctebns_forward(x, params):
    """x: [T, B, Cin, H, W] float32. Returns spikes [T, B, Cout, H, W] bfloat16 (exact 0/1)."""
    T, B, Cin, H, W = x.shape
    w_conv, b_conv, gamma, beta, run_mean, run_var, p = params
    Cout = w_conv.shape[0]

    Wp = W + 2                    # padded row width (left/right halo)
    Hpad = H + 3                  # 1 top halo + 2 slack rows so all flat shifted reads stay in-bounds
    L = Hpad * Wp
    No = H * Wp                   # output pixel (h, w) lives at lane column h*Wp + w
    shifts = tuple(kh * Wp + kw for kh in range(3) for kw in range(3))
    K = 10 * Cin                  # 9 tap slabs + 1 bias slab
    Cout_pad = ((Cout + 15) // 16) * 16   # whole bf16 (16,128) output tiles, unmasked stores

    # Cast first, pad in bf16 (half the pad HBM traffic), flatten each frame.
    xin = jnp.pad(x.astype(jnp.bfloat16),
                  ((0, 0), (0, 0), (0, 0), (1, 2), (1, 1))).reshape(T, B, Cin, L)

    # Fold conv bias + eval-mode BN (running stats) + TEBN per-time-step scale p[t]
    # into one weight matrix per t; bias sits in column 9*Cin (matmul'd with the ones row).
    inv_sigma = gamma / jnp.sqrt(run_var + EPS)                             # [Cout]
    w_taps = jnp.transpose(w_conv, (0, 2, 3, 1)).reshape(Cout, 9 * Cin)     # col (kh*3+kw)*Cin+ci
    bias = (b_conv - run_mean) * inv_sigma + beta                           # [Cout]
    wk = jnp.zeros((Cout, K), jnp.float32)
    wk = wk.at[:, :9 * Cin].set(w_taps * inv_sigma[:, None])
    wk = wk.at[:, 9 * Cin].set(bias)
    w_fold = (p[:, None, None] * wk[None]).astype(jnp.bfloat16)             # [T, Cout, K]
    w_fold = jnp.pad(w_fold, ((0, 0), (0, Cout_pad - Cout), (0, 0)))        # zero rows -> 0 spikes

    kernel = functools.partial(_ctebns_kernel, t_steps=T, cin=Cin, no=No, shifts=shifts)

    # Per-image VMEM (double-buffered x/out + resident weights + tap scratch) is ~130 KB here;
    # if T/H/W/C scale up, re-derive against v7x's 64 MiB VMEM and set vmem_limit_bytes.
    out = pl.pallas_call(
        kernel,
        out_shape=jax.ShapeDtypeStruct((T, B, Cout_pad, No), jnp.bfloat16),
        grid_spec=pltpu.PrefetchScalarGridSpec(
            num_scalar_prefetch=0,
            grid=(B,),                                     # image axis only; T handled in-kernel
            in_specs=[
                pl.BlockSpec((T, 1, Cin, L), lambda b: (0, b, 0, 0)),
                pl.BlockSpec((T, Cout_pad, K), lambda b: (0, 0, 0)),   # resident: DMA'd once
            ],
            out_specs=pl.BlockSpec((T, 1, Cout_pad, No), lambda b: (0, b, 0, 0)),
            scratch_shapes=[pltpu.VMEM((K, No), jnp.bfloat16)],
        ),
        compiler_params=pltpu.CompilerParams(
            # B is the only (parallel) grid axis -> both v7x TensorCores when B >= 2.
            # TODO(synk): if deployed with B == 1, split H into row-aligned chunks instead.
            dimension_semantics=("parallel",)),
    )(xin, w_fold)

    # Valid pixel (h, w) sits at flat column h*Wp + w; drop padded channels + halo columns.
    out = out[:, :, :Cout, :].reshape(T, B, Cout, H, Wp)[..., :W]
    return out   # bf16 spikes (exactly 0/1); cast in the consumer if f32 is required


def reference_forward(x, params):
    """Pure-JAX f32 reference (XLA conv + scan LIF) for a sanity check."""
    T, B, Cin, H, W = x.shape
    w_conv, b_conv, gamma, beta, run_mean, run_var, p = params

    xx = jnp.transpose(x, (0, 1, 3, 4, 2)).reshape(T * B, H, W, Cin)
    w_hwio = jnp.transpose(w_conv, (2, 3, 1, 0))
    y = lax.conv_general_dilated(
        xx, w_hwio, window_strides=(1, 1), padding="SAME",
        dimension_numbers=("NHWC", "HWIO", "NHWC")) + b_conv
    y = y.reshape(T, B, H, W, -1)
    y = (y - run_mean) / jnp.sqrt(run_var + EPS) * gamma + beta
    y = y * p[:, None, None, None, None]

    def step(v, yt):
        v = v + (yt - v) / TAU
        s = (v >= V_TH).astype(jnp.float32)
        return v * (1.0 - s), s

    _, spikes = lax.scan(step, jnp.zeros(y.shape[1:], jnp.float32), y)
    return jnp.transpose(spikes, (0, 1, 4, 2, 3))


if __name__ == "__main__":
    key = jax.random.PRNGKey(0)
    T, B, Cin, Cout, H, W = 4, 2, 4, 8, 16, 16
    ks = jax.random.split(key, 8)

    x = jax.random.normal(ks[0], (T, B, Cin, H, W), jnp.float32)
    w_conv = 0.2 * jax.random.normal(ks[1], (Cout, Cin, 3, 3), jnp.float32)
    b_conv = 0.1 * jax.random.normal(ks[2], (Cout,), jnp.float32)
    gamma = 1.0 + 0.1 * jax.random.normal(ks[3], (Cout,), jnp.float32)
    beta = 0.1 * jax.random.normal(ks[4], (Cout,), jnp.float32)
    run_mean = 0.1 * jax.random.normal(ks[5], (Cout,), jnp.float32)
    run_var = 1.0 + 0.1 * jax.random.uniform(ks[6], (Cout,), jnp.float32)
    p = 1.0 + 0.1 * jax.random.normal(ks[7], (T,), jnp.float32)
    params = (w_conv, b_conv, gamma, beta, run_mean, run_var, p)

    out = jax.block_until_ready(ctebns_forward(x, params))
    ref = reference_forward(x, params)

    assert out.shape == (T, B, Cout, H, W)
    assert out.dtype == jnp.bfloat16
    assert bool(jnp.all((out == 0.0) | (out == 1.0)))
    # bf16 weights/activations can flip spikes whose membrane lands within rounding distance
    # of V_TH vs the f32 reference; compare mean spike disagreement (fraction of pixels).
    assert float(jnp.mean(jnp.abs(out.astype(jnp.float32) - ref))) < 3e-2
    print("KERNEL_OK")
</pallas_src>

<mosaic_0001>
module attributes {stable_mosaic.version = 11 : i64} {
  func.func @_ctebns_kernel(%arg0: i32, %arg1: memref<4x1x4x342xbf16, #tpu.memory_space<vmem>>, %arg2: memref<4x16x40xbf16, #tpu.memory_space<vmem>>, %arg3: memref<4x1x16x288xbf16, #tpu.memory_space<vmem>>, %arg4: memref<40x288xbf16, #tpu.memory_space<vmem>>) attributes {dimension_semantics = [#tpu.dimension_semantics<parallel>], iteration_bounds = array<i64: 2>, scalar_prefetch = 0 : i64, scratch_operands = 1 : i64, tpu.core_type = #tpu.core_type<tc>, window_params = [{transform_indices = @transform_0, window_bounds = array<i64: 4, 1, 4, 342>}, {pipeline_mode = #tpu.pipeline_mode<synchronous>, transform_indices = @transform_1, window_bounds = array<i64: 4, 16, 40>}, {transform_indices = @transform_2, window_bounds = array<i64: 4, 1, 16, 288>}]} {
    %0 = tpu.iota {dimensions = array<i32: 0>} : vector<4x288xi32>
    %c0_i32 = arith.constant 0 : i32
    %1 = vector.broadcast %c0_i32 : i32 to vector<4x288xi32>
    %2 = arith.cmpi eq, %0, %1 : vector<4x288xi32>
    %3 = arith.extui %2 : vector<4x288xi1> to vector<4x288xi32>
    %4 = arith.sitofp %3 : vector<4x288xi32> to vector<4x288xf32>
    %5 = arith.truncf %4 : vector<4x288xf32> to vector<4x288xbf16>
    %c36 = arith.constant 36 : index
    %c0 = arith.constant 0 : index
    %6 = vector.load %arg4[%c36, %c0] : memref<40x288xbf16, #tpu.memory_space<vmem>>, vector<4x288xbf16>
    tpu.vector_store %arg4[%c36, %c0], %5 {strides = array<i32>} : memref<40x288xbf16, #tpu.memory_space<vmem>>, vector<4x288xbf16>,
    %cst = arith.constant 0.000000e+00 : f32
    %7 = vector.broadcast %cst : f32 to vector<16x288xf32>
    %c0_i32_0 = arith.constant 0 : i32
    %8 = arith.index_cast %c0_i32_0 : i32 to index
    %c0_1 = arith.constant 0 : index
    %c0_2 = arith.constant 0 : index
    %c0_3 = arith.constant 0 : index
    %9 = vector.load %arg1[%8, %c0_1, %c0_2, %c0_3] : memref<4x1x4x342xbf16, #tpu.memory_space<vmem>>, vector<1x1x4x342xbf16>
    %10 = vector.shape_cast %9 : vector<1x1x4x342xbf16> to vector<4x342xbf16>
    %11 = vector.extract_strided_slice %10 {offsets = [0, 0], sizes = [4, 288], strides = [1, 1]} : vector<4x342xbf16> to vector<4x288xbf16>
    %c0_4 = arith.constant 0 : index
    %c0_5 = arith.constant 0 : index
    %12 = vector.load %arg4[%c0_4, %c0_5] : memref<40x288xbf16, #tpu.memory_space<vmem>>, vector<4x288xbf16>
    tpu.vector_store %arg4[%c0_4, %c0_5], %11 {strides = array<i32>} : memref<40x288xbf16, #tpu.memory_space<vmem>>, vector<4x288xbf16>,
    %13 = vector.extract_strided_slice %10 {offsets = [0, 1], sizes = [4, 288], strides = [1, 1]} : vector<4x342xbf16> to vector<4x288xbf16>
    %c4 = arith.constant 4 : index
    %c0_6 = arith.constant 0 : index
    %14 = vector.load %arg4[%c4, %c0_6] : memref<40x288xbf16, #tpu.memory_space<vmem>>, vector<4x288xbf16>
    tpu.vector_store %arg4[%c4, %c0_6], %13 {strides = array<i32>} : memref<40x288xbf16, #tpu.memory_space<vmem>>, vector<4x288xbf16>,
    %15 = vector.extract_strided_slice %10 {offsets = [0, 2], sizes = [4, 288], strides = [1, 1]} : vector<4x342xbf16> to vector<4x288xbf16>
    %c8 = arith.constant 8 : index
    %c0_7 = arith.constant 0 : index
    %16 = vector.load %arg4[%c8, %c0_7] : memref<40x288xbf16, #tpu.memory_space<vmem>>, vector<4x288xbf16>
    tpu.vector_store %arg4[%c8, %c0_7], %15 {strides = array<i32>} : memref<40x288xbf16, #tpu.memory_space<vmem>>, vector<4x288xbf16>,
    %17 = vector.extract_strided_slice %10 {offsets = [0, 18], sizes = [4, 288], strides = [1, 1]} : vector<4x342xbf16> to vector<4x288xbf16>
    %c12 = arith.constant 12 : index
    %c0_8 = arith.constant 0 : index
    %18 = vector.load %arg4[%c12, %c0_8] : memref<40x288xbf16, #tpu.memory_space<vmem>>, vector<4x288xbf16>
    tpu.vector_store %arg4[%c12, %c0_8], %17 {strides = array<i32>} : memref<40x288xbf16, #tpu.memory_space<vmem>>, vector<4x288xbf16>,
    %19 = vector.extract_strided_slice %10 {offsets = [0, 19], sizes = [4, 288], strides = [1, 1]} : vector<4x342xbf16> to vector<4x288xbf16>
    %c16 = arith.constant 16 : index
    %c0_9 = arith.constant 0 : index
    %20 = vector.load %arg4[%c16, %c0_9] : memref<40x288xbf16, #tpu.memory_space<vmem>>, vector<4x288xbf16>
    tpu.vector_store %arg4[%c16, %c0_9], %19 {strides = array<i32>} : memref<40x288xbf16, #tpu.memory_space<vmem>>, vector<4x288xbf16>,
    %21 = vector.extract_strided_slice %10 {offsets = [0, 20], sizes = [4, 288], strides = [1, 1]} : vector<4x342xbf16> to vector<4x288xbf16>
    %c20 = arith.constant 20 : index
    %c0_10 = arith.constant 0 : index
    %22 = vector.load %arg4[%c20, %c0_10] : memref<40x288xbf16, #tpu.memory_space<vmem>>, vector<4x288xbf16>
    tpu.vector_store %arg4[%c20, %c0_10], %21 {strides = array<i32>} : memref<40x288xbf16, #tpu.memory_space<vmem>>, vector<4x288xbf16>,
    %23 = vector.extract_strided_slice %10 {offsets = [0, 36], sizes = [4, 288], strides = [1, 1]} : vector<4x342xbf16> to vector<4x288xbf16>
    %c24 = arith.constant 24 : index
    %c0_11 = arith.constant 0 : index
    %24 = vector.load %arg4[%c24, %c0_11] : memref<40x288xbf16, #tpu.memory_space<vmem>>, vector<4x288xbf16>
    tpu.vector_store %arg4[%c24, %c0_11], %23 {strides = array<i32>} : memref<40x288xbf16, #tpu.memory_space<vmem>>, vector<4x288xbf16>,
    %25 = vector.extract_strided_slice %10 {offsets = [0, 37], sizes = [4, 288], strides = [1, 1]} : vector<4x342xbf16> to vector<4x288xbf16>
    %c28 = arith.constant 28 : index
    %c0_12 = arith.constant 0 : index
    %26 = vector.load %arg4[%c28, %c0_12] : memref<40x288xbf16, #tpu.memory_space<vmem>>, vector<4x288xbf16>
    tpu.vector_store %arg4[%c28, %c0_12], %25 {strides = array<i32>} : memref<40x288xbf16, #tpu.memory_space<vmem>>, vector<4x288xbf16>,
    %27 = vector.extract_strided_slice %10 {offsets = [0, 38], sizes = [4, 288], strides = [1, 1]} : vector<4x342xbf16> to vector<4x288xbf16>
    %c32 = arith.constant 32 : index
    %c0_13 = arith.constant 0 : index
    %28 = vector.load %arg4[%c32, %c0_13] : memref<40x288xbf16, #tpu.memory_space<vmem>>, vector<4x288xbf16>
    tpu.vector_store %arg4[%c32, %c0_13], %27 {strides = array<i32>} : memref<40x288xbf16, #tpu.memory_space<vmem>>, vector<4x288xbf16>,
    %29 = arith.index_cast %c0_i32_0 : i32 to index
    %c0_14 = arith.constant 0 : index
    %c0_15 = arith.constant 0 : index
    %30 = vector.load %arg2[%29, %c0_14, %c0_15] : memref<4x16x40xbf16, #tpu.memory_space<vmem>>, vector<1x16x40xbf16>
    %31 = vector.shape_cast %30 : vector<1x16x40xbf16> to vector<16x40xbf16>
    %c0_16 = arith.constant 0 : index
    %c0_17 = arith.constant 0 : index
    %32 = vector.load %arg4[%c0_16, %c0_17] : memref<40x288xbf16, #tpu.memory_space<vmem>>, vector<40x288xbf16>
    %cst_18 = arith.constant dense<0.000000e+00> : vector<16x288xf32>
    %33 = tpu.matmul %31, %32, %cst_18 {dimension_numbers = #tpu.dot_dimension_numbers<[1], [0], [0], [1], [0, 0, 1, 1], [], []>} : vector<16x40xbf16>, vector<40x288xbf16>, vector<16x288xf32> -> vector<16x288xf32>
    %34 = arith.addf %7, %33 : vector<16x288xf32>
    %cst_19 = arith.constant 5.000000e-01 : f32
    %35 = vector.broadcast %cst_19 : f32 to vector<16x288xf32>
    %36 = arith.mulf %35, %34 : vector<16x288xf32>
    %cst_20 = arith.constant 1.000000e+00 : f32
    %37 = vector.broadcast %cst_20 : f32 to vector<16x288xf32>
    %38 = arith.cmpf oge, %36, %37 : vector<16x288xf32>
    %39 = arith.extui %38 : vector<16x288xi1> to vector<16x288xi32>
    %40 = arith.sitofp %39 : vector<16x288xi32> to vector<16x288xf32>
    %41 = arith.truncf %40 : vector<16x288xf32> to vector<16x288xbf16>
    %42 = arith.index_cast %c0_i32_0 : i32 to index
    %c0_21 = arith.constant 0 : index
    %c0_22 = arith.constant 0 : index
    %c0_23 = arith.constant 0 : index
    %43 = vector.load %arg3[%42, %c0_21, %c0_22, %c0_23] : memref<4x1x16x288xbf16, #tpu.memory_space<vmem>>, vector<1x1x16x288xbf16>
    %44 = vector.shape_cast %43 : vector<1x1x16x288xbf16> to vector<16x288xbf16>
    %45 = vector.shape_cast %41 : vector<16x288xbf16> to vector<1x1x16x288xbf16>
    tpu.vector_store %arg3[%42, %c0_21, %c0_22, %c0_23], %45 {strides = array<i32>} : memref<4x1x16x288xbf16, #tpu.memory_space<vmem>>, vector<1x1x16x288xbf16>,
    %cst_24 = arith.constant 0.000000e+00 : f32
    %46 = vector.broadcast %cst_24 : f32 to vector<16x288xf32>
    %47 = arith.select %38, %46, %36 : vector<16x288xi1>, vector<16x288xf32>
    %c1_i32 = arith.constant 1 : i32
    %48 = arith.index_cast %c1_i32 : i32 to index
    %c0_25 = arith.constant 0 : index
    %c0_26 = arith.constant 0 : index
    %c0_27 = arith.constant 0 : index
    %49 = vector.load %arg1[%48, %c0_25, %c0_26, %c0_27] : memref<4x1x4x342xbf16, #tpu.memory_space<vmem>>, vector<1x1x4x342xbf16>
    %50 = vector.shape_cast %49 : vector<1x1x4x342xbf16> to vector<4x342xbf16>
    %51 = vector.extract_strided_slice %50 {offsets = [0, 0], sizes = [4, 288], strides = [1, 1]} : vector<4x342xbf16> to vector<4x288xbf16>
    %c0_28 = arith.constant 0 : index
    %c0_29 = arith.constant 0 : index
    %52 = vector.load %arg4[%c0_28, %c0_29] : memref<40x288xbf16, #tpu.memory_space<vmem>>, vector<4x288xbf16>
    tpu.vector_store %arg4[%c0_28, %c0_29], %51 {strides = array<i32>} : memref<40x288xbf16, #tpu.memory_space<vmem>>, vector<4x288xbf16>,
    %53 = vector.extract_strided_slice %50 {offsets = [0, 1], sizes = [4, 288], strides = [1, 1]} : vector<4x342xbf16> to vector<4x288xbf16>
    %c4_30 = arith.constant 4 : index
    %c0_31 = arith.constant 0 : index
    %54 = vector.load %arg4[%c4_30, %c0_31] : memref<40x288xbf16, #tpu.memory_space<vmem>>, vector<4x288xbf16>
    tpu.vector_store %arg4[%c4_30, %c0_31], %53 {strides = array<i32>} : memref<40x288xbf16, #tpu.memory_space<vmem>>, vector<4x288xbf16>,
    %55 = vector.extract_strided_slice %50 {offsets = [0, 2], sizes = [4, 288], strides = [1, 1]} : vector<4x342xbf16> to vector<4x288xbf16>
    %c8_32 = arith.constant 8 : index
    %c0_33 = arith.constant 0 : index
    %56 = vector.load %arg4[%c8_32, %c0_33] : memref<40x288xbf16, #tpu.memory_space<vmem>>, vector<4x288xbf16>
    tpu.vector_store %arg4[%c8_32, %c0_33], %55 {strides = array<i32>} : memref<40x288xbf16, #tpu.memory_space<vmem>>, vector<4x288xbf16>,
    %57 = vector.extract_strided_slice %50 {offsets = [0, 18], sizes = [4, 288], strides = [1, 1]} : vector<4x342xbf16> to vector<4x288xbf16>
    %c12_34 = arith.constant 12 : index
    %c0_35 = arith.constant 0 : index
    %58 = vector.load %arg4[%c12_34, %c0_35] : memref<40x288xbf16, #tpu.memory_space<vmem>>, vector<4x288xbf16>
    tpu.vector_store %arg4[%c12_34, %c0_35], %57 {strides = array<i32>} : memref<40x288xbf16, #tpu.memory_space<vmem>>, vector<4x288xbf16>,
    %59 = vector.extract_strided_slice %50 {offsets = [0, 19], sizes = [4, 288], strides = [1, 1]} : vector<4x342xbf16> to vector<4x288xbf16>
    %c16_36 = arith.constant 16 : index
    %c0_37 = arith.constant 0 : index
    %60 = vector.load %arg4[%c16_36, %c0_37] : memref<40x288xbf16, #tpu.memory_space<vmem>>, vector<4x288xbf16>
    tpu.vector_store %arg4[%c16_36, %c0_37], %59 {strides = array<i32>} : memref<40x288xbf16, #tpu.memory_space<vmem>>, vector<4x288xbf16>,
    %61 = vector.extract_strided_slice %50 {offsets = [0, 20], sizes = [4, 288], strides = [1, 1]} : vector<4x342xbf16> to vector<4x288xbf16>
    %c20_38 = arith.constant 20 : index
    %c0_39 = arith.constant 0 : index
    %62 = vector.load %arg4[%c20_38, %c0_39] : memref<40x288xbf16, #tpu.memory_space<vmem>>, vector<4x288xbf16>
    tpu.vector_store %arg4[%c20_38, %c0_39], %61 {strides = array<i32>} : memref<40x288xbf16, #tpu.memory_space<vmem>>, vector<4x288xbf16>,
    %63 = vector.extract_strided_slice %50 {offsets = [0, 36], sizes = [4, 288], strides = [1, 1]} : vector<4x342xbf16> to vector<4x288xbf16>
    %c24_40 = arith.constant 24 : index
    %c0_41 = arith.constant 0 : index
    %64 = vector.load %arg4[%c24_40, %c0_41] : memref<40x288xbf16, #tpu.memory_space<vmem>>, vector<4x288xbf16>
    tpu.vector_store %arg4[%c24_40, %c0_41], %63 {strides = array<i32>} : memref<40x288xbf16, #tpu.memory_space<vmem>>, vector<4x288xbf16>,
    %65 = vector.extract_strided_slice %50 {offsets = [0, 37], sizes = [4, 288], strides = [1, 1]} : vector<4x342xbf16> to vector<4x288xbf16>
    %c28_42 = arith.constant 28 : index
    %c0_43 = arith.constant 0 : index
    %66 = vector.load %arg4[%c28_42, %c0_43] : memref<40x288xbf16, #tpu.memory_space<vmem>>, vector<4x288xbf16>
    tpu.vector_store %arg4[%c28_42, %c0_43], %65 {strides = array<i32>} : memref<40x288xbf16, #tpu.memory_space<vmem>>, vector<4x288xbf16>,
    %67 = vector.extract_strided_slice %50 {offsets = [0, 38], sizes = [4, 288], strides = [1, 1]} : vector<4x342xbf16> to vector<4x288xbf16>
    %c32_44 = arith.constant 32 : index
    %c0_45 = arith.constant 0 : index
    %68 = vector.load %arg4[%c32_44, %c0_45] : memref<40x288xbf16, #tpu.memory_space<vmem>>, vector<4x288xbf16>
    tpu.vector_store %arg4[%c32_44, %c0_45], %67 {strides = array<i32>} : memref<40x288xbf16, #tpu.memory_space<vmem>>, vector<4x288xbf16>,
    %69 = arith.index_cast %c1_i32 : i32 to index
    %c0_46 = arith.constant 0 : index
    %c0_47 = arith.constant 0 : index
    %70 = vector.load %arg2[%69, %c0_46, %c0_47] : memref<4x16x40xbf16, #tpu.memory_space<vmem>>, vector<1x16x40xbf16>
    %71 = vector.shape_cast %70 : vector<1x16x40xbf16> to vector<16x40xbf16>
    %c0_48 = arith.constant 0 : index
    %c0_49 = arith.constant 0 : index
    %72 = vector.load %arg4[%c0_48, %c0_49] : memref<40x288xbf16, #tpu.memory_space<vmem>>, vector<40x288xbf16>
    %cst_50 = arith.constant dense<0.000000e+00> : vector<16x288xf32>
    %73 = tpu.matmul %71, %72, %cst_50 {dimension_numbers = #tpu.dot_dimension_numbers<[1], [0], [0], [1], [0, 0, 1, 1], [], []>} : vector<16x40xbf16>, vector<40x288xbf16>, vector<16x288xf32> -> vector<16x288xf32>
    %74 = arith.addf %47, %73 : vector<16x288xf32>
    %cst_51 = arith.constant 5.000000e-01 : f32
    %75 = vector.broadcast %cst_51 : f32 to vector<16x288xf32>
    %76 = arith.mulf %75, %74 : vector<16x288xf32>
    %cst_52 = arith.constant 1.000000e+00 : f32
    %77 = vector.broadcast %cst_52 : f32 to vector<16x288xf32>
    %78 = arith.cmpf oge, %76, %77 : vector<16x288xf32>
    %79 = arith.extui %78 : vector<16x288xi1> to vector<16x288xi32>
    %80 = arith.sitofp %79 : vector<16x288xi32> to vector<16x288xf32>
    %81 = arith.truncf %80 : vector<16x288xf32> to vector<16x288xbf16>
    %82 = arith.index_cast %c1_i32 : i32 to index
    %c0_53 = arith.constant 0 : index
    %c0_54 = arith.constant 0 : index
    %c0_55 = arith.constant 0 : index
    %83 = vector.load %arg3[%82, %c0_53, %c0_54, %c0_55] : memref<4x1x16x288xbf16, #tpu.memory_space<vmem>>, vector<1x1x16x288xbf16>
    %84 = vector.shape_cast %83 : vector<1x1x16x288xbf16> to vector<16x288xbf16>
    %85 = vector.shape_cast %81 : vector<16x288xbf16> to vector<1x1x16x288xbf16>
    tpu.vector_store %arg3[%82, %c0_53, %c0_54, %c0_55], %85 {strides = array<i32>} : memref<4x1x16x288xbf16, #tpu.memory_space<vmem>>, vector<1x1x16x288xbf16>,
    %cst_56 = arith.constant 0.000000e+00 : f32
    %86 = vector.broadcast %cst_56 : f32 to vector<16x288xf32>
    %87 = arith.select %78, %86, %76 : vector<16x288xi1>, vector<16x288xf32>
    %c2_i32 = arith.constant 2 : i32
    %88 = arith.index_cast %c2_i32 : i32 to index
    %c0_57 = arith.constant 0 : index
    %c0_58 = arith.constant 0 : index
    %c0_59 = arith.constant 0 : index
    %89 = vector.load %arg1[%88, %c0_57, %c0_58, %c0_59] : memref<4x1x4x342xbf16, #tpu.memory_space<vmem>>, vector<1x1x4x342xbf16>
    %90 = vector.shape_cast %89 : vector<1x1x4x342xbf16> to vector<4x342xbf16>
    %91 = vector.extract_strided_slice %90 {offsets = [0, 0], sizes = [4, 288], strides = [1, 1]} : vector<4x342xbf16> to vector<4x288xbf16>
    %c0_60 = arith.constant 0 : index
    %c0_61 = arith.constant 0 : index
    %92 = vector.load %arg4[%c0_60, %c0_61] : memref<40x288xbf16, #tpu.memory_space<vmem>>, vector<4x288xbf16>
    tpu.vector_store %arg4[%c0_60, %c0_61], %91 {strides = array<i32>} : memref<40x288xbf16, #tpu.memory_space<vmem>>, vector<4x288xbf16>,
    %93 = vector.extract_strided_slice %90 {offsets = [0, 1], sizes = [4, 288], strides = [1, 1]} : vector<4x342xbf16> to vector<4x288xbf16>
    %c4_62 = arith.constant 4 : index
    %c0_63 = arith.constant 0 : index
    %94 = vector.load %arg4[%c4_62, %c0_63] : memref<40x288xbf16, #tpu.memory_space<vmem>>, vector<4x288xbf16>
    tpu.vector_store %arg4[%c4_62, %c0_63], %93 {strides = array<i32>} : memref<40x288xbf16, #tpu.memory_space<vmem>>, vector<4x288xbf16>,
    %95 = vector.extract_strided_slice %90 {offsets = [0, 2], sizes = [4, 288], strides = [1, 1]} : vector<4x342xbf16> to vector<4x288xbf16>
    %c8_64 = arith.constant 8 : index
    %c0_65 = arith.constant 0 : index
    %96 = vector.load %arg4[%c8_64, %c0_65] : memref<40x288xbf16, #tpu.memory_space<vmem>>, vector<4x288xbf16>
    tpu.vector_store %arg4[%c8_64, %c0_65], %95 {strides = array<i32>} : memref<40x288xbf16, #tpu.memory_space<vmem>>, vector<4x288xbf16>,
    %97 = vector.extract_strided_slice %90 {offsets = [0, 18], sizes = [4, 288], strides = [1, 1]} : vector<4x342xbf16> to vector<4x288xbf16>
    %c12_66 = arith.constant 12 : index
    %c0_67 = arith.constant 0 : index
    %98 = vector.load %arg4[%c12_66, %c0_67] : memref<40x288xbf16, #tpu.memory_space<vmem>>, vector<4x288xbf16>
    tpu.vector_store %arg4[%c12_66, %c0_67], %97 {strides = array<i32>} : memref<40x288xbf16, #tpu.memory_space<vmem>>, vector<4x288xbf16>,
    %99 = vector.extract_strided_slice %90 {offsets = [0, 19], sizes = [4, 288], strides = [1, 1]} : vector<4x342xbf16> to vector<4x288xbf16>
    %c16_68 = arith.constant 16 : index
    %c0_69 = arith.constant 0 : index
    %100 = vector.load %arg4[%c16_68, %c0_69] : memref<40x288xbf16, #tpu.memory_space<vmem>>, vector<4x288xbf16>
    tpu.vector_store %arg4[%c16_68, %c0_69], %99 {strides = array<i32>} : memref<40x288xbf16, #tpu.memory_space<vmem>>, vector<4x288xbf16>,
    %101 = vector.extract_strided_slice %90 {offsets = [0, 20], sizes = [4, 288], strides = [1, 1]} : vector<4x342xbf16> to vector<4x288xbf16>
    %c20_70 = arith.constant 20 : index
    %c0_71 = arith.constant 0 : index
    %102 = vector.load %arg4[%c20_70, %c0_71] : memref<40x288xbf16, #tpu.memory_space<vmem>>, vector<4x288xbf16>
    tpu.vector_store %arg4[%c20_70, %c0_71], %101 {strides = array<i32>} : memref<40x288xbf16, #tpu.memory_space<vmem>>, vector<4x288xbf16>,
    %103 = vector.extract_strided_slice %90 {offsets = [0, 36], sizes = [4, 288], strides = [1, 1]} : vector<4x342xbf16> to vector<4x288xbf16>
    %c24_72 = arith.constant 24 : index
    %c0_73 = arith.constant 0 : index
    %104 = vector.load %arg4[%c24_72, %c0_73] : memref<40x288xbf16, #tpu.memory_space<vmem>>, vector<4x288xbf16>
    tpu.vector_store %arg4[%c24_72, %c0_73], %103 {strides = array<i32>} : memref<40x288xbf16, #tpu.memory_space<vmem>>, vector<4x288xbf16>,
    %105 = vector.extract_strided_slice %90 {offsets = [0, 37], sizes = [4, 288], strides = [1, 1]} : vector<4x342xbf16> to vector<4x288xbf16>
    %c28_74 = arith.constant 28 : index
    %c0_75 = arith.constant 0 : index
    %106 = vector.load %arg4[%c28_74, %c0_75] : memref<40x288xbf16, #tpu.memory_space<vmem>>, vector<4x288xbf16>
    tpu.vector_store %arg4[%c28_74, %c0_75], %105 {strides = array<i32>} : memref<40x288xbf16, #tpu.memory_space<vmem>>, vector<4x288xbf16>,
    %107 = vector.extract_strided_slice %90 {offsets = [0, 38], sizes = [4, 288], strides = [1, 1]} : vector<4x342xbf16> to vector<4x288xbf16>
    %c32_76 = arith.constant 32 : index
    %c0_77 = arith.constant 0 : index
    %108 = vector.load %arg4[%c32_76, %c0_77] : memref<40x288xbf16, #tpu.memory_space<vmem>>, vector<4x288xbf16>
    tpu.vector_store %arg4[%c32_76, %c0_77], %107 {strides = array<i32>} : memref<40x288xbf16, #tpu.memory_space<vmem>>, vector<4x288xbf16>,
    %109 = arith.index_cast %c2_i32 : i32 to index
    %c0_78 = arith.constant 0 : index
    %c0_79 = arith.constant 0 : index
    %110 = vector.load %arg2[%109, %c0_78, %c0_79] : memref<4x16x40xbf16, #tpu.memory_space<vmem>>, vector<1x16x40xbf16>
    %111 = vector.shape_cast %110 : vector<1x16x40xbf16> to vector<16x40xbf16>
    %c0_80 = arith.constant 0 : index
    %c0_81 = arith.constant 0 : index
    %112 = vector.load %arg4[%c0_80, %c0_81] : memref<40x288xbf16, #tpu.memory_space<vmem>>, vector<40x288xbf16>
    %cst_82 = arith.constant dense<0.000000e+00> : vector<16x288xf32>
    %113 = tpu.matmul %111, %112, %cst_82 {dimension_numbers = #tpu.dot_dimension_numbers<[1], [0], [0], [1], [0, 0, 1, 1], [], []>} : vector<16x40xbf16>, vector<40x288xbf16>, vector<16x288xf32> -> vector<16x288xf32>
    %114 = arith.addf %87, %113 : vector<16x288xf32>
    %cst_83 = arith.constant 5.000000e-01 : f32
    %115 = vector.broadcast %cst_83 : f32 to vector<16x288xf32>
    %116 = arith.mulf %115, %114 : vector<16x288xf32>
    %cst_84 = arith.constant 1.000000e+00 : f32
    %117 = vector.broadcast %cst_84 : f32 to vector<16x288xf32>
    %118 = arith.cmpf oge, %116, %117 : vector<16x288xf32>
    %119 = arith.extui %118 : vector<16x288xi1> to vector<16x288xi32>
    %120 = arith.sitofp %119 : vector<16x288xi32> to vector<16x288xf32>
    %121 = arith.truncf %120 : vector<16x288xf32> to vector<16x288xbf16>
    %122 = arith.index_cast %c2_i32 : i32 to index
    %c0_85 = arith.constant 0 : index
    %c0_86 = arith.constant 0 : index
    %c0_87 = arith.constant 0 : index
    %123 = vector.load %arg3[%122, %c0_85, %c0_86, %c0_87] : memref<4x1x16x288xbf16, #tpu.memory_space<vmem>>, vector<1x1x16x288xbf16>
    %124 = vector.shape_cast %123 : vector<1x1x16x288xbf16> to vector<16x288xbf16>
    %125 = vector.shape_cast %121 : vector<16x288xbf16> to vector<1x1x16x288xbf16>
    tpu.vector_store %arg3[%122, %c0_85, %c0_86, %c0_87], %125 {strides = array<i32>} : memref<4x1x16x288xbf16, #tpu.memory_space<vmem>>, vector<1x1x16x288xbf16>,
    %cst_88 = arith.constant 0.000000e+00 : f32
    %126 = vector.broadcast %cst_88 : f32 to vector<16x288xf32>
    %127 = arith.select %118, %126, %116 : vector<16x288xi1>, vector<16x288xf32>
    %c3_i32 = arith.constant 3 : i32
    %128 = arith.index_cast %c3_i32 : i32 to index
    %c0_89 = arith.constant 0 : index
    %c0_90 = arith.constant 0 : index
    %c0_91 = arith.constant 0 : index
    %129 = vector.load %arg1[%128, %c0_89, %c0_90, %c0_91] : memref<4x1x4x342xbf16, #tpu.memory_space<vmem>>, vector<1x1x4x342xbf16>
    %130 = vector.shape_cast %129 : vector<1x1x4x342xbf16> to vector<4x342xbf16>
    %131 = vector.extract_strided_slice %130 {offsets = [0, 0], sizes = [4, 288], strides = [1, 1]} : vector<4x342xbf16> to vector<4x288xbf16>
    %c0_92 = arith.constant 0 : index
    %c0_93 = arith.constant 0 : index
    %132 = vector.load %arg4[%c0_92, %c0_93] : memref<40x288xbf16, #tpu.memory_space<vmem>>, vector<4x288xbf16>
    tpu.vector_store %arg4[%c0_92, %c0_93], %131 {strides = array<i32>} : memref<40x288xbf16, #tpu.memory_space<vmem>>, vector<4x288xbf16>,
    %133 = vector.extract_strided_slice %130 {offsets = [0, 1], sizes = [4, 288], strides = [1, 1]} : vector<4x342xbf16> to vector<4x288xbf16>
    %c4_94 = arith.constant 4 : index
    %c0_95 = arith.constant 0 : index
    %134 = vector.load %arg4[%c4_94, %c0_95] : memref<40x288xbf16, #tpu.memory_space<vmem>>, vector<4x288xbf16>
    tpu.vector_store %arg4[%c4_94, %c0_95], %133 {strides = array<i32>} : memref<40x288xbf16, #tpu.memory_space<vmem>>, vector<4x288xbf16>,
    %135 = vector.extract_strided_slice %130 {offsets = [0, 2], sizes = [4, 288], strides = [1, 1]} : vector<4x342xbf16> to vector<4x288xbf16>
    %c8_96 = arith.constant 8 : index
    %c0_97 = arith.constant 0 : index
    %136 = vector.load %arg4[%c8_96, %c0_97] : memref<40x288xbf16, #tpu.memory_space<vmem>>, vector<4x288xbf16>
    tpu.vector_store %arg4[%c8_96, %c0_97], %135 {strides = array<i32>} : memref<40x288xbf16, #tpu.memory_space<vmem>>, vector<4x288xbf16>,
    %137 = vector.extract_strided_slice %130 {offsets = [0, 18], sizes = [4, 288], strides = [1, 1]} : vector<4x342xbf16> to vector<4x288xbf16>
    %c12_98 = arith.constant 12 : index
    %c0_99 = arith.constant 0 : index
    %138 = vector.load %arg4[%c12_98, %c0_99] : memref<40x288xbf16, #tpu.memory_space<vmem>>, vector<4x288xbf16>
    tpu.vector_store %arg4[%c12_98, %c0_99], %137 {strides = array<i32>} : memref<40x288xbf16, #tpu.memory_space<vmem>>, vector<4x288xbf16>,
    %139 = vector.extract_strided_slice %130 {offsets = [0, 19], sizes = [4, 288], strides = [1, 1]} : vector<4x342xbf16> to vector<4x288xbf16>
    %c16_100 = arith.constant 16 : index
    %c0_101 = arith.constant 0 : index
    %140 = vector.load %arg4[%c16_100, %c0_101] : memref<40x288xbf16, #tpu.memory_space<vmem>>, vector<4x288xbf16>
    tpu.vector_store %arg4[%c16_100, %c0_101], %139 {strides = array<i32>} : memref<40x288xbf16, #tpu.memory_space<vmem>>, vector<4x288xbf16>,
    %141 = vector.extract_strided_slice %130 {offsets = [0, 20], sizes = [4, 288], strides = [1, 1]} : vector<4x342xbf16> to vector<4x288xbf16>
    %c20_102 = arith.constant 20 : index
    %c0_103 = arith.constant 0 : index
    %142 = vector.load %arg4[%c20_102, %c0_103] : memref<40x288xbf16, #tpu.memory_space<vmem>>, vector<4x288xbf16>
    tpu.vector_store %arg4[%c20_102, %c0_103], %141 {strides = array<i32>} : memref<40x288xbf16, #tpu.memory_space<vmem>>, vector<4x288xbf16>,
    %143 = vector.extract_strided_slice %130 {offsets = [0, 36], sizes = [4, 288], strides = [1, 1]} : vector<4x342xbf16> to vector<4x288xbf16>
    %c24_104 = arith.constant 24 : index
    %c0_105 = arith.constant 0 : index
    %144 = vector.load %arg4[%c24_104, %c0_105] : memref<40x288xbf16, #tpu.memory_space<vmem>>, vector<4x288xbf16>
    tpu.vector_store %arg4[%c24_104, %c0_105], %143 {strides = array<i32>} : memref<40x288xbf16, #tpu.memory_space<vmem>>, vector<4x288xbf16>,
    %145 = vector.extract_strided_slice %130 {offsets = [0, 37], sizes = [4, 288], strides = [1, 1]} : vector<4x342xbf16> to vector<4x288xbf16>
    %c28_106 = arith.constant 28 : index
    %c0_107 = arith.constant 0 : index
    %146 = vector.load %arg4[%c28_106, %c0_107] : memref<40x288xbf16, #tpu.memory_space<vmem>>, vector<4x288xbf16>
    tpu.vector_store %arg4[%c28_106, %c0_107], %145 {strides = array<i32>} : memref<40x288xbf16, #tpu.memory_space<vmem>>, vector<4x288xbf16>,
    %147 = vector.extract_strided_slice %130 {offsets = [0, 38], sizes = [4, 288], strides = [1, 1]} : vector<4x342xbf16> to vector<4x288xbf16>
    %c32_108 = arith.constant 32 : index
    %c0_109 = arith.constant 0 : index
    %148 = vector.load %arg4[%c32_108, %c0_109] : memref<40x288xbf16, #tpu.memory_space<vmem>>, vector<4x288xbf16>
    tpu.vector_store %arg4[%c32_108, %c0_109], %147 {strides = array<i32>} : memref<40x288xbf16, #tpu.memory_space<vmem>>, vector<4x288xbf16>,
    %149 = arith.index_cast %c3_i32 : i32 to index
    %c0_110 = arith.constant 0 : index
    %c0_111 = arith.constant 0 : index
    %150 = vector.load %arg2[%149, %c0_110, %c0_111] : memref<4x16x40xbf16, #tpu.memory_space<vmem>>, vector<1x16x40xbf16>
    %151 = vector.shape_cast %150 : vector<1x16x40xbf16> to vector<16x40xbf16>
    %c0_112 = arith.constant 0 : index
    %c0_113 = arith.constant 0 : index
    %152 = vector.load %arg4[%c0_112, %c0_113] : memref<40x288xbf16, #tpu.memory_space<vmem>>, vector<40x288xbf16>
    %cst_114 = arith.constant dense<0.000000e+00> : vector<16x288xf32>
    %153 = tpu.matmul %151, %152, %cst_114 {dimension_numbers = #tpu.dot_dimension_numbers<[1], [0], [0], [1], [0, 0, 1, 1], [], []>} : vector<16x40xbf16>, vector<40x288xbf16>, vector<16x288xf32> -> vector<16x288xf32>
    %154 = arith.addf %127, %153 : vector<16x288xf32>
    %cst_115 = arith.constant 5.000000e-01 : f32
    %155 = vector.broadcast %cst_115 : f32 to vector<16x288xf32>
    %156 = arith.mulf %155, %154 : vector<16x288xf32>
    %cst_116 = arith.constant 1.000000e+00 : f32
    %157 = vector.broadcast %cst_116 : f32 to vector<16x288xf32>
    %158 = arith.cmpf oge, %156, %157 : vector<16x288xf32>
    %159 = arith.extui %158 : vector<16x288xi1> to vector<16x288xi32>
    %160 = arith.sitofp %159 : vector<16x288xi32> to vector<16x288xf32>
    %161 = arith.truncf %160 : vector<16x288xf32> to vector<16x288xbf16>
    %162 = arith.index_cast %c3_i32 : i32 to index
    %c0_117 = arith.constant 0 : index
    %c0_118 = arith.constant 0 : index
    %c0_119 = arith.constant 0 : index
    %163 = vector.load %arg3[%162, %c0_117, %c0_118, %c0_119] : memref<4x1x16x288xbf16, #tpu.memory_space<vmem>>, vector<1x1x16x288xbf16>
    %164 = vector.shape_cast %163 : vector<1x1x16x288xbf16> to vector<16x288xbf16>
    %165 = vector.shape_cast %161 : vector<16x288xbf16> to vector<1x1x16x288xbf16>
    tpu.vector_store %arg3[%162, %c0_117, %c0_118, %c0_119], %165 {strides = array<i32>} : memref<4x1x16x288xbf16, #tpu.memory_space<vmem>>, vector<1x1x16x288xbf16>,
    %cst_120 = arith.constant 0.000000e+00 : f32
    %166 = vector.broadcast %cst_120 : f32 to vector<16x288xf32>
    %167 = arith.select %158, %166, %156 : vector<16x288xi1>, vector<16x288xf32>
    %c4_i32 = arith.constant 4 : i32
    return
  }
  func.func @transform_0(%arg0: i32) -> (i32, i32, i32, i32) {
    %c0_i32 = arith.constant 0 : i32
    %c0_i32_0 = arith.constant 0 : i32
    %c0_i32_1 = arith.constant 0 : i32
    %c0_i32_2 = arith.constant 0 : i32
    return %c0_i32, %arg0, %c0_i32_0, %c0_i32_1 : i32, i32, i32, i32
  }
  func.func @transform_1(%arg0: i32) -> (i32, i32, i32) {
    %c0_i32 = arith.constant 0 : i32
    %c0_i32_0 = arith.constant 0 : i32
    %c0_i32_1 = arith.constant 0 : i32
    %c0_i32_2 = arith.constant 0 : i32
    return %c0_i32, %c0_i32_0, %c0_i32_1 : i32, i32, i32
  }
  func.func @transform_2(%arg0: i32) -> (i32, i32, i32, i32) {
    %c0_i32 = arith.constant 0 : i32
    %c0_i32_0 = arith.constant 0 : i32
    %c0_i32_1 = arith.constant 0 : i32
    %c0_i32_2 = arith.constant 0 : i32
    return %c0_i32, %arg0, %c0_i32_0, %c0_i32_1 : i32, i32, i32, i32
  }
}

</mosaic_0001>

<llo_original>
// kernel: tpu_custom_call.1
$region0: #{tpu_custom_call.1}
  #allocation0 [shape = 'u32[]', space=smem, size = 0x4, offset = 0x4, fixed_abs, tag = 'smem constant byte address 0x4 - core index']
  #allocation1 [shape = 'u32[144,128]{1,0:T(1,128)}', space=vmem, size = 0x12000, scoped, tag = 'internal scratch']
  #allocation2 [shape = 'bf16[40,288]{1,0:T(8,128)(2,1)}', space=vmem, size = 0x7800, scoped, tag = 'scratch operand']
  #allocation9 [shape = 's32[]', space=sflag, size = 0x4, offset = 0, fixed_abs, tag = 'sflag constant byte address 0x0 - dummy sync flag']
  %s0 = inlined_call_operand.hbm [shape: bf16[4,2,4,342], index: 0, kind: input, shape index: {}]
  %s1 = inlined_call_operand.hbm [shape: bf16[4,16,40], index: 1, kind: input, shape index: {}]
  %s2 = inlined_call_operand.hbm [shape: bf16[4,2,16,288], index: 2, kind: output, shape index: {}]
  %s3 = sld [smem:[#allocation0]]
  $region49: #{tpu_custom_call.1} parent=0
    _
  %s5 = ssub.s32 1, %s3
  %s6 = scalar_select 0, %s5, %s3
  $region1: #{tpu_custom_call.1} parent=0
    #allocation3 [shape = 'u8[24576]{0}', space=vmem, size = 0x6000, scoped, tag = 'input window, operand 0']
    #allocation4 [shape = 's32[2]{0}', space=sflag, size = 0x8, scoped, tag = 'scoped memory for tpu_custom_call.1']
    #allocation5 [shape = 's32[2]{0}', space=sflag, size = 0x8, scoped, tag = 'scoped memory for tpu_custom_call.1']
    #allocation6 [shape = 'u8[16384]{0}', space=vmem, size = 0x4000, scoped, tag = 'input window, operand 1, single buffered']
    #allocation7 [shape = 's32[1]{0}', space=sflag, size = 0x4, scoped, tag = 'scoped memory for tpu_custom_call.1']
    #allocation8 [shape = 'u8[98304]{0}', space=vmem, size = 0x18000, scoped, tag = 'output window, operand 0']
    %7 = vsyncpa [#allocation4], 0
    %s8 = scalar_lea.sflag [#allocation4], 1
    %9 = vsyncpa %s8, 0
    %10 = vsyncpa [#allocation7], 0
    %11 = vsyncpa [#allocation5], 0
    %s12 = scalar_lea.sflag [#allocation5], 1
    %13 = vsyncpa %s12, 0
    loop: start=0, step=1, limit=4
    $region2: #{tpu_custom_call.1} parent=1 // loop_pre_header
      _
    $region3: #{tpu_custom_call.1} parent=1 // loop_header
      %s15 = sphi 0, %s19
      %p16 = scmp.ge.s32.totalorder %s15, 4
      %s25 = sphi 0, %s27
      %s28 = sphi 0, %s25
      %s29 = sphi 0, %s28
      %s45 = sphi 0, %s29
      %s49 = sphi 0, %s49
      %s51 = sphi 0, %s49
      %s52 = sphi 0, %s51
      %s66 = sphi 0, %s52
      %s72 = sphi 0, %s74
      %s75 = sphi 0, %s72
      %s76 = sphi 0, %s75
      %s92 = sphi 0, %s76
    $region4: #{tpu_custom_call.1} parent=1 // loop_header_branch
      %18 = sbr.rel (%p16) target = $region8
    $region5: #{tpu_custom_call.1} parent=1 // loop_body
      %s20 = ssub.s32 %s15, 1
      %s21 = ssub.s32 %s15, 2
      %s22 = sadd.s32 %s15, 1
      %s23 = ssub.s32 %s15, %s22
      %p24 = scmp.eq.s32.totalorder %s23, 0
      %s26 = sadd.s32 %s25, 1
      %s27 = scalar_select %p24, %s25, %s26
      %p30 = pneg %p24
      %p31 = scmp.eq.s32.totalorder %s15, 1
      %p32 = por %p30, %p31
      %p33 = scmp.ne.s32.totalorder %s25, %s28
      %p34 = scmp.eq.s32.totalorder %s15, 0
      %p35 = por %p33, %p34
      %p36 = scmp.ne.s32.totalorder %s25, %s28
      %p37 = scmp.eq.s32.totalorder %s20, 1
      %p38 = por %p36, %p37
      %p39 = scmp.ne.s32.totalorder %s28, %s29
      %p40 = scmp.eq.s32.totalorder %s20, 0
      %p41 = por %p39, %p40
      %p42 = scmp.ne.s32.totalorder %s28, %s29
      %p43 = scmp.eq.s32.totalorder %s21, 1
      %p44 = por %p42, %p43
      %p46 = scmp.ne.s32.totalorder %s29, %s45
      %p47 = scmp.eq.s32.totalorder %s21, 0
      %p48 = por %p46, %p47
      %s50 = sadd.s32 %s49, 1
      %p53 = scmp.eq.s32.totalorder %s15, 1
      %p54 = scmp.ne.s32.totalorder %s49, %s51
      %p55 = scmp.eq.s32.totalorder %s15, 0
      %p56 = por %p54, %p55
      %p57 = scmp.ne.s32.totalorder %s49, %s51
      %p58 = scmp.eq.s32.totalorder %s20, 1
      %p59 = por %p57, %p58
      %p60 = scmp.ne.s32.totalorder %s51, %s52
      %p61 = scmp.eq.s32.totalorder %s20, 0
      %p62 = por %p60, %p61
      %p63 = scmp.ne.s32.totalorder %s51, %s52
      %p64 = scmp.eq.s32.totalorder %s21, 1
      %p65 = por %p63, %p64
      %p67 = scmp.ne.s32.totalorder %s52, %s66
      %p68 = scmp.eq.s32.totalorder %s21, 0
      %p69 = por %p67, %p68
      %s70 = ssub.s32 %s15, %s22
      %p71 = scmp.eq.s32.totalorder %s70, 0
      %s73 = sadd.s32 %s72, 1
      %s74 = scalar_select %p71, %s72, %s73
      %p77 = pneg %p71
      %p78 = scmp.eq.s32.totalorder %s15, 1
      %p79 = por %p77, %p78
      %p80 = scmp.ne.s32.totalorder %s72, %s75
      %p81 = scmp.eq.s32.totalorder %s15, 0
      %p82 = por %p80, %p81
      %p83 = scmp.ne.s32.totalorder %s72, %s75
      %p84 = scmp.eq.s32.totalorder %s20, 1
      %p85 = por %p83, %p84
      %p86 = scmp.ne.s32.totalorder %s75, %s76
      %p87 = scmp.eq.s32.totalorder %s20, 0
      %p88 = por %p86, %p87
      %p89 = scmp.ne.s32.totalorder %s75, %s76
      %p90 = scmp.eq.s32.totalorder %s21, 1
      %p91 = por %p89, %p90
      %p93 = scmp.ne.s32.totalorder %s76, %s92
      %p94 = scmp.eq.s32.totalorder %s21, 0
      %p95 = por %p93, %p94
      %p96 = scmp.le.s32.totalorder 1, %s15
      %p97 = scmp.lt.s32.totalorder %s15, 3
      %p98 = pnand %p96, %p97
      %p99 = pneg %p98
      // Predicated region
      $region9: #{tpu_custom_call.1} parent=5 // pred_check
        _
      $region10: #{tpu_custom_call.1} parent=5 // pred_check_branch
        %101 = sbr.rel (%p98) target = $region12
      $region11: #{tpu_custom_call.1} parent=5 // pred_region
        %s102 = ssub.s32 %s15, 1
        // Predicated region
        $region13: #{tpu_custom_call.1} parent=11 // pred_check
          %p103 = pneg %p62
        $region14: #{tpu_custom_call.1} parent=11 // pred_check_branch
          %105 = sbr.rel (%p103) target = $region16
        $region15: #{tpu_custom_call.1} parent=11 // pred_region
          %s107 = ssub.s32 512, 512
          %108 = vsyncadd [#allocation7], %s107
          %s109 = sshll.u32 [#allocation6], 4
          %s110 = int_to_ptr.vmem [resolvable:$true] %s109
          %115 = dma.hbm_to_vmem [thread:$0]  %s1, 512, %s110, [#allocation7], 64, 64, 4
        $region16: #{tpu_custom_call.1} parent=11 // pred_fallthru
          _
      $region12: #{tpu_custom_call.1} parent=5 // pred_fallthru
        _
      %p116 = scmp.lt.s32.totalorder %s15, 2
      // Predicated region
      $region17: #{tpu_custom_call.1} parent=5 // pred_check
        %p117 = pneg %p116
      $region18: #{tpu_custom_call.1} parent=5 // pred_check_branch
        %119 = sbr.rel (%p117) target = $region20
      $region19: #{tpu_custom_call.1} parent=5 // pred_region
        // Predicated region
        $region21: #{tpu_custom_call.1} parent=19 // pred_check
          %p120 = pneg %p35
        $region22: #{tpu_custom_call.1} parent=19 // pred_check_branch
          %122 = sbr.rel (%p120) target = $region24
        $region23: #{tpu_custom_call.1} parent=19 // pred_region
          %s123 = sand.u32 %s25, 1
          %s124 = scalar_lea.sflag [#allocation4], %s123
          %s125 = sand.u32 %s25, 1
          %s126 = smul.addr %s125, 24
          %s127 = scalar_lea.vmem [#allocation3], %s126
          %s129 = ssub.s32 384, 384
          %130 = vsyncadd %s124, %s129
          %s131 = smul.addr %s15, 3
          %s132 = smul.addr %s131, 32
          %s133 = scalar_lea.hbm %s0, %s132
          %s134 = sshll.u32 %s127, 4
          %s135 = int_to_ptr.vmem [resolvable:$true] %s134
          %140 = dma.hbm_to_vmem [thread:$0]  %s133, 384, %s135, %s124, 192, 96, 6
        $region24: #{tpu_custom_call.1} parent=19 // pred_fallthru
          _
      $region20: #{tpu_custom_call.1} parent=5 // pred_fallthru
        _
      %p141 = scmp.le.s32.totalorder 1, %s15
      %p142 = scmp.lt.s32.totalorder %s15, 3
      %p143 = pnand %p141, %p142
      %p144 = pneg %p143
      // Predicated region
      $region25: #{tpu_custom_call.1} parent=5 // pred_check
        _
      $region26: #{tpu_custom_call.1} parent=5 // pred_check_branch
        %146 = sbr.rel (%p143) target = $region28
      $region27: #{tpu_custom_call.1} parent=5 // pred_region
        %s147 = ssub.s32 %s15, 1
        %s148 = sand.u32 %s28, 1
        %s149 = scalar_lea.sflag [#allocation4], %s148
        %s150 = sand.u32 %s28, 1
        %s151 = smul.addr %s150, 24
        %s152 = scalar_lea.vmem [#allocation3], %s151
        // Predicated region
        $region29: #{tpu_custom_call.1} parent=27 // pred_check
          %p153 = pneg %p41
        $region30: #{tpu_custom_call.1} parent=27 // pred_check_branch
          %155 = sbr.rel (%p153) target = $region32
        $region31: #{tpu_custom_call.1} parent=27 // pred_region
          %156 = dma.done %s149, 384
        $region32: #{tpu_custom_call.1} parent=27 // pred_fallthru
          _
        // Predicated region
        $region33: #{tpu_custom_call.1} parent=27 // pred_check
          %p157 = pneg %p62
        $region34: #{tpu_custom_call.1} parent=27 // pred_check_branch
          %159 = sbr.rel (%p157) target = $region36
        $region35: #{tpu_custom_call.1} parent=27 // pred_region
          %160 = dma.done [#allocation7], 512
        $region36: #{tpu_custom_call.1} parent=27 // pred_fallthru
          _
        %s161 = sand.u32 %s28, 1
        %s162 = scalar_lea.sflag [#allocation4], %s161
        %s163 = sand.u32 %s28, 1
        %s164 = smul.addr %s163, 24
        %s165 = scalar_lea.vmem [#allocation3], %s164
        %p166 = pneg %p41
        %p167 = pneg %p38
        %p168 = pneg %p62
        %p169 = pneg %p59
        %p170 = pneg %p88
        %p171 = pneg %p85
        %s172 = sand.u32 %s75, 1
        %s173 = scalar_lea.sflag [#allocation5], %s172
        %s174 = sand.u32 %s75, 1
        %s175 = smul.addr %s174, 96
        %s176 = scalar_lea.vmem [#allocation8], %s175
        %v178 = vlaneseq
        %v179 = vshrl.u32 %v178, 7
        %vm180 = vcmp.eq.s32.totalorder %v179, 0
        %v181 = vsel %vm180, 1, 0
        %v182 = vcvt.s32.f32 %v181
        %v183 = vpack.c.bf16 %v182, %v182
        %v186 = vunpack.c.l.s4 839922192
        %v187 = vunpack.c.0.s8 %v186
        %v188 = vlaneseq
        %v189 = vshrl.u32 %v188, 7
        %v190 = vsub.s32 %v187, %v189
        %v191 = vrot.slane %v183, %v190
        %v192 = vrot.slane %v191, 6
        %194 = vst [vmem:[#allocation2 + $0x30] sm:$0xcc] %v192
        %vm195 = vcmask 257026
        %196 = vst.msk [vmem:[#allocation2 + $0x38] sm:$0xc] %vm195, %v192
        %v197 = vld [vmem:[%s152] sm:$0x3f]
        %v199 = vcombine.high %v197, %v197
        %v201 = vunpack.c.l.s4 1983009808
        %v202 = vunpack.c.0.s8 %v201
        %v203 = vlaneseq
        %v204 = vshrl.u32 %v203, 7
        %v205 = vsub.s32 %v202, %v204
        %v206 = vrot.slane %v197, %v205
        %v208 = vunpack.c.l.s4 1983009808
        %v209 = vunpack.c.0.s8 %v208
        %v210 = vlaneseq
        %v211 = vshrl.u32 %v210, 7
        %v212 = vsub.s32 %v209, %v211
        %v213 = vrot.slane %v199, %v212
        %216 = vst [vmem:[#allocation2] sm:$0x33] %v206
        %vm217 = vcmask 254976
        %218 = vst.msk [vmem:[#allocation2 + $0x8] sm:$0x3] %vm217, %v213
        %v219 = vcombine.low %v197, %v197
        %v221 = vunpack.c.l.s4 1983009808
        %v222 = vunpack.c.0.s8 %v221
        %v223 = vlaneseq
        %v224 = vshrl.u32 %v223, 7
        %v225 = vsub.s32 %v222, %v224
        %v226 = vrot.slane %v219, %v225
        %227 = vrot.lane.b32.xlu0 %v226, 127
        %v228 = vpop.permute.xlu0 %227
        %229 = vrot.lane.b32.xlu0 %v206, 127
        %v230 = vpop.permute.xlu0 %229
        %v231 = vrot.slane %v228, 4
        %v232 = vrot.slane %v230, 4
        %vm233 = vcmask 1043456
        %v234 = vsel %vm233, %v231, %v232
        %vm235 = vcmask 1039360
        %v236 = vsel %vm235, %v228, %v234
        %239 = vst [vmem:[#allocation2] sm:$0xcc] %v236
        %240 = vst.msk [vmem:[#allocation2 + $0x8] sm:$0xc] %vm195, %v230
        %241 = vrot.lane.b32.xlu0 %v206, 126
        %v242 = vpop.permute.xlu0 %241
        %243 = vrot.lane.b32.xlu0 %v213, 126
        %v244 = vpop.permute.xlu0 %243
        %v245 = vrot.slane %v242, 4
        %v246 = vrot.slane %v244, 4
        %v247 = vsel %vm233, %v245, %v246
        %vm248 = vcmask 1031168
        %v249 = vsel %vm248, %v242, %v247
        %252 = vst [vmem:[#allocation2 + $0xc] sm:$0x33] %v249
        %253 = vst.msk [vmem:[#allocation2 + $0x14] sm:$0x3] %vm217, %v244
        %254 = vrot.lane.b32.xlu0 %v226, 110
        %v255 = vpop.permute.xlu0 %254
        %256 = vrot.lane.b32.xlu0 %v206, 110
        %v257 = vpop.permute.xlu0 %256
        %v258 = vrot.slane %v255, 4
        %v259 = vrot.slane %v257, 4
        %v260 = vsel %vm233, %v258, %v259
        %vm261 = vcmask 900096
        %v262 = vsel %vm261, %v255, %v260
        %265 = vst [vmem:[#allocation2 + $0xc] sm:$0xcc] %v262
        %266 = vst.msk [vmem:[#allocation2 + $0x14] sm:$0xc] %vm195, %v257
        %267 = vrot.lane.b32.xlu0 %v206, 109
        %v268 = vpop.permute.xlu0 %267
        %269 = vrot.lane.b32.xlu0 %v213, 109
        %v270 = vpop.permute.xlu0 %269
        %v271 = vrot.slane %v268, 4
        %v272 = vrot.slane %v270, 4
        %v273 = vsel %vm233, %v271, %v272
        %vm274 = vcmask 891904
        %v275 = vsel %vm274, %v268, %v273
        %278 = vst [vmem:[#allocation2 + $0x18] sm:$0x33] %v275
        %279 = vst.msk [vmem:[#allocation2 + $0x20] sm:$0x3] %vm217, %v270
        %280 = vrot.lane.b32.xlu0 %v226, 108
        %v281 = vpop.permute.xlu0 %280
        %282 = vrot.lane.b32.xlu0 %v206, 108
        %v283 = vpop.permute.xlu0 %282
        %v284 = vrot.slane %v281, 4
        %v285 = vrot.slane %v283, 4
        %v286 = vsel %vm233, %v284, %v285
        %vm287 = vcmask 883712
        %v288 = vsel %vm287, %v281, %v286
        %291 = vst [vmem:[#allocation2 + $0x18] sm:$0xcc] %v288
        %292 = vst.msk [vmem:[#allocation2 + $0x20] sm:$0xc] %vm195, %v283
        %293 = vrot.lane.b32.xlu0 %v206, 92
        %v294 = vpop.permute.xlu0 %293
        %295 = vrot.lane.b32.xlu0 %v213, 92
        %v296 = vpop.permute.xlu0 %295
        %v297 = vrot.slane %v294, 4
        %v298 = vrot.slane %v296, 4
        %v299 = vsel %vm233, %v297, %v298
        %vm300 = vcmask 752640
        %v301 = vsel %vm300, %v294, %v299
        %304 = vst [vmem:[#allocation2 + $0x24] sm:$0x33] %v301
        %305 = vst.msk [vmem:[#allocation2 + $0x2c] sm:$0x3] %vm217, %v296
        %306 = vrot.lane.b32.xlu0 %v226, 91
        %v307 = vpop.permute.xlu0 %306
        %308 = vrot.lane.b32.xlu0 %v206, 91
        %v309 = vpop.permute.xlu0 %308
        %v310 = vrot.slane %v307, 4
        %v311 = vrot.slane %v309, 4
        %v312 = vsel %vm233, %v310, %v311
        %vm313 = vcmask 744448
        %v314 = vsel %vm313, %v307, %v312
        %317 = vst [vmem:[#allocation2 + $0x24] sm:$0xcc] %v314
        %318 = vst.msk [vmem:[#allocation2 + $0x2c] sm:$0xc] %vm195, %v309
        %319 = vrot.lane.b32.xlu0 %v206, 90
        %v320 = vpop.permute.xlu0 %319
        %321 = vrot.lane.b32.xlu0 %v213, 90
        %v322 = vpop.permute.xlu0 %321
        %v323 = vrot.slane %v320, 4
        %v324 = vrot.slane %v322, 4
        %v325 = vsel %vm233, %v323, %v324
        %vm326 = vcmask 736256
        %v327 = vsel %vm326, %v320, %v325
        %330 = vst [vmem:[#allocation2 + $0x30] sm:$0x33] %v327
        %331 = vst.msk [vmem:[#allocation2 + $0x38] sm:$0x3] %vm217, %v322
        %v332 = vld [vmem:[#allocation6] sm:$0xf]
        %v333 = vld [vmem:[#allocation6 + $0x4] sm:$0xf]
        %v334 = vld [vmem:[#allocation2] sm:$0xff]
        %v335 = vld [vmem:[#allocation2 + $0x8] sm:$0xf]
        %v336 = vld [vmem:[#allocation2 + $0xc] sm:$0xff]
        %v337 = vld [vmem:[#allocation2 + $0x14] sm:$0xf]
        %v338 = vld [vmem:[#allocation2 + $0x18] sm:$0xff]
        %v339 = vld [vmem:[#allocation2 + $0x20] sm:$0xf]
        %v340 = vld [vmem:[#allocation2 + $0x24] sm:$0xff]
        %v341 = vld [vmem:[#allocation2 + $0x2c] sm:$0xf]
        %v342 = vld [vmem:[#allocation2 + $0x30] sm:$0xff]
        %v343 = vld [vmem:[#allocation2 + $0x38] sm:$0xf]
        %v346 = vunpack.c.l.b16 %v332
        %v347 = vunpack.c.l.b16 %v333
        %v348 = vpack.c.b16 %v347, %v346
        %v359 = vunpack.c.l.b16 %v334
        %v360 = vunpack.c.h.b16 %v334
        %v361 = vunpack.c.l.b16 %v335
        %v362 = vunpack.c.l.b16 %v336
        %v363 = vunpack.c.h.b16 %v336
        %v364 = vunpack.c.l.b16 %v337
        %v365 = vunpack.c.l.b16 %v338
        %v366 = vunpack.c.h.b16 %v338
        %v367 = vunpack.c.l.b16 %v339
        %v368 = vunpack.c.l.b16 %v340
        %v369 = vunpack.c.h.b16 %v340
        %v370 = vunpack.c.l.b16 %v341
        %v371 = vunpack.c.l.b16 %v342
        %v372 = vunpack.c.h.b16 %v342
        %v373 = vunpack.c.l.b16 %v343
        %v374 = vpack.c.b16 %v362, %v359
        %v375 = vpack.c.b16 %v363, %v360
        %v376 = vpack.c.b16 %v364, %v361
        %v377 = vpack.c.b16 %v368, %v365
        %v378 = vpack.c.b16 %v369, %v366
        %v379 = vpack.c.b16 %v370, %v367
        %v380 = vpack.c.b16 %v371, %v371
        %v381 = vpack.c.b16 %v372, %v372
        %v382 = vpack.c.b16 %v373, %v373
        %vm389 = vcmask 326656
        %v391 = vsel %vm389, %v348, 0
        %vm393 = vcmask 1043456
        %v395 = vsel %vm393, %v380, 0
        %v398 = vsel %vm393, %v381, 0
        %v401 = vsel %vm393, %v382, 0
        %403 = vmatprep.subr.bf16.mxu0 0
        %404 = vmatpush1.bf16.msra.mxu0 0
        %405 = vmatprep.subr.bf16.mxu0 0
        %406 = vmatpush1.bf16.msra.mxu0 0
        %407 = vmatprep.subr.bf16.mxu0 0
        %408 = vmatpush1.bf16.msra.mxu0 0
        %409 = vmatprep.subr.bf16.mxu0 0
        %410 = vmatpush1.bf16.msra.mxu0 0
        %411 = vmatprep.subr.bf16.mxu0 0
        %412 = vmatpush1.bf16.msra.mxu0 0
        %413 = vmatprep.subr.bf16.mxu0 %v398
        %414 = vmatpush1.bf16.msra.mxu0 %v395
        %415 = vmatprep.subr.bf16.mxu0 %v378
        %416 = vmatpush1.bf16.msra.mxu0 %v377
        %417 = vmatprep.subr.bf16.mxu0 %v375
        %418 = vmatpush1.bf16.msra.mxu0 %v374
        %419 = vmatprep.subr.bf16.mxu0 0
        %420 = vmatpush2.bf16.msra.mxu0 0
        %421 = vmatprep.subr.bf16.mxu0 0
        %422 = vmatpush2.bf16.msra.mxu0 0
        %423 = vmatprep.subr.bf16.mxu0 0
        %424 = vmatpush2.bf16.msra.mxu0 0
        %425 = vmatprep.subr.bf16.mxu0 0
        %426 = vmatpush2.bf16.msra.mxu0 0
        %427 = vmatprep.subr.bf16.mxu0 0
        %428 = vmatpush2.bf16.msra.mxu0 0
        %429 = vmatprep.subr.bf16.mxu0 0
        %430 = vmatpush2.bf16.msra.mxu0 0
        %431 = vmatprep.subr.bf16.mxu0 0
        %432 = vmatpush2.bf16.msra.mxu0 0
        %433 = vmatprep.subr.bf16.mxu0 0
        %434 = vmatpush2.bf16.msra.mxu0 0
        %435 = vmatprep.mubr.bf16.mxu0 0
        %436 = vmatmul.mubr.bf16.gmra.mxu0 %v391
        %v437 = vpop.f32.mrf.mxu0
        %v438 = vadd.f32 0.0, %v437
        %v439 = vpop.f32.mrf.mxu0
        %v440 = vadd.f32 0.0, %v439
        %v441 = vpop.f32.mrf.mxu0
        %v442 = vadd.f32 0.0, %v441
        %v443 = vpop.f32.mrf.mxu0
        %v444 = vadd.f32 0.0, %v443
        %445 = vdwg.mxu0
        %446 = vmatprep.subr.bf16.mxu0 0
        %447 = vmatpush1.bf16.msra.mxu0 0
        %448 = vmatprep.subr.bf16.mxu0 0
        %449 = vmatpush1.bf16.msra.mxu0 0
        %450 = vmatprep.subr.bf16.mxu0 0
        %451 = vmatpush1.bf16.msra.mxu0 0
        %452 = vmatprep.subr.bf16.mxu0 0
        %453 = vmatpush1.bf16.msra.mxu0 0
        %454 = vmatprep.subr.bf16.mxu0 0
        %455 = vmatpush1.bf16.msra.mxu0 0
        %456 = vmatprep.subr.bf16.mxu0 0
        %457 = vmatpush1.bf16.msra.mxu0 %v401
        %458 = vmatprep.subr.bf16.mxu0 0
        %459 = vmatpush1.bf16.msra.mxu0 %v379
        %460 = vmatprep.subr.bf16.mxu0 0
        %461 = vmatpush1.bf16.msra.mxu0 %v376
        %462 = vmatprep.subr.bf16.mxu0 0
        %463 = vmatpush2.bf16.msra.mxu0 0
        %464 = vmatprep.subr.bf16.mxu0 0
        %465 = vmatpush2.bf16.msra.mxu0 0
        %466 = vmatprep.subr.bf16.mxu0 0
        %467 = vmatpush2.bf16.msra.mxu0 0
        %468 = vmatprep.subr.bf16.mxu0 0
        %469 = vmatpush2.bf16.msra.mxu0 0
        %470 = vmatprep.subr.bf16.mxu0 0
        %471 = vmatpush2.bf16.msra.mxu0 0
        %472 = vmatprep.subr.bf16.mxu0 0
        %473 = vmatpush2.bf16.msra.mxu0 0
        %474 = vmatprep.subr.bf16.mxu0 0
        %475 = vmatpush2.bf16.msra.mxu0 0
        %476 = vmatprep.subr.bf16.mxu0 0
        %477 = vmatpush2.bf16.msra.mxu0 0
        %478 = vmatprep.mubr.bf16.mxu0 0
        %479 = vmatmul.mubr.bf16.gmra.mxu0 %v391
        %v480 = vpop.f32.mrf.mxu0
        %v481 = vadd.f32 0.0, %v480
        %v482 = vpop.f32.mrf.mxu0
        %v483 = vpop.f32.mrf.mxu0
        %v484 = vadd.f32 0.0, %v483
        %v485 = vpop.f32.mrf.mxu0
        %486 = vdwg.mxu0
        %v487 = vmul.f32 %v438, 0.5
        %v488 = vmul.f32 %v440, 0.5
        %v489 = vmul.f32 %v481, 0.5
        %v490 = vmul.f32 %v442, 0.5
        %v491 = vmul.f32 %v444, 0.5
        %v492 = vmul.f32 %v484, 0.5
        %vm493 = vcmp.ge.f32.partialorder %v487, 1.0
        %vm494 = vcmp.ge.f32.partialorder %v488, 1.0
        %vm495 = vcmp.ge.f32.partialorder %v489, 1.0
        %vm496 = vcmp.ge.f32.partialorder %v490, 1.0
        %vm497 = vcmp.ge.f32.partialorder %v491, 1.0
        %vm498 = vcmp.ge.f32.partialorder %v492, 1.0
        %v499 = vsel %vm493, 1, 0
        %v500 = vsel %vm494, 1, 0
        %v501 = vsel %vm495, 1, 0
        %v502 = vsel %vm496, 1, 0
        %v503 = vsel %vm497, 1, 0
        %v504 = vsel %vm498, 1, 0
        %v505 = vcvt.s32.f32 %v499
        %v506 = vcvt.s32.f32 %v500
        %v507 = vcvt.s32.f32 %v501
        %v508 = vcvt.s32.f32 %v502
        %v509 = vcvt.s32.f32 %v503
        %v510 = vcvt.s32.f32 %v504
        %v511 = vpack.c.bf16 %v508, %v505
        %v512 = vpack.c.bf16 %v509, %v506
        %v513 = vpack.c.bf16 %v510, %v507
        %v517 = vunpack.c.l.b16 %v511
        %v518 = vunpack.c.l.b16 %v512
        %v519 = vunpack.c.l.b16 %v513
        %v520 = vunpack.c.h.b16 %v511
        %v521 = vunpack.c.h.b16 %v512
        %v522 = vunpack.c.h.b16 %v513
        %v523 = vpack.c.b16 %v518, %v517
        %v524 = vpack.c.b16 %v519, %v519
        %v525 = vpack.c.b16 %v521, %v520
        %v526 = vpack.c.b16 %v522, %v522
        %531 = vst [vmem:[%s176] sm:$0xff] %v523
        %vm532 = vcmask 257024
        %533 = vst.msk [vmem:[%s176 + $0x8] sm:$0xf] %vm532, %v524
        %534 = vst [vmem:[%s176 + $0xc] sm:$0xff] %v525
        %535 = vst.msk [vmem:[%s176 + $0x14] sm:$0xf] %vm532, %v526
        %v536 = vsel %vm493, 0.0, %v487
        %v537 = vsel %vm494, 0.0, %v488
        %v538 = vsel %vm495, 0.0, %v489
        %v539 = vsel %vm496, 0.0, %v490
        %v540 = vsel %vm497, 0.0, %v491
        %v541 = vsel %vm498, 0.0, %v492
        %s542 = scalar_lea.vmem %s152, 6 [#allocation3]
        %v543 = vld [vmem:[%s542] sm:$0x3f]
        %v545 = vcombine.high %v543, %v543
        %v547 = vunpack.c.l.s4 1983009808
        %v548 = vunpack.c.0.s8 %v547
        %v549 = vlaneseq
        %v550 = vshrl.u32 %v549, 7
        %v551 = vsub.s32 %v548, %v550
        %v552 = vrot.slane %v543, %v551
        %v554 = vunpack.c.l.s4 1983009808
        %v555 = vunpack.c.0.s8 %v554
        %v556 = vlaneseq
        %v557 = vshrl.u32 %v556, 7
        %v558 = vsub.s32 %v555, %v557
        %v559 = vrot.slane %v545, %v558
        %562 = vst [vmem:[#allocation2] sm:$0x33] %v552
        %563 = vst.msk [vmem:[#allocation2 + $0x8] sm:$0x3] %vm217, %v559
        %v564 = vcombine.low %v543, %v543
        %v566 = vunpack.c.l.s4 1983009808
        %v567 = vunpack.c.0.s8 %v566
        %v568 = vlaneseq
        %v569 = vshrl.u32 %v568, 7
        %v570 = vsub.s32 %v567, %v569
        %v571 = vrot.slane %v564, %v570
        %572 = vrot.lane.b32.xlu0 %v571, 127
        %v573 = vpop.permute.xlu0 %572
        %574 = vrot.lane.b32.xlu0 %v552, 127
        %v575 = vpop.permute.xlu0 %574
        %v576 = vrot.slane %v573, 4
        %v577 = vrot.slane %v575, 4
        %v578 = vsel %vm233, %v576, %v577
        %v579 = vsel %vm235, %v573, %v578
        %582 = vst [vmem:[#allocation2] sm:$0xcc] %v579
        %583 = vst.msk [vmem:[#allocation2 + $0x8] sm:$0xc] %vm195, %v575
        %584 = vrot.lane.b32.xlu0 %v552, 126
        %v585 = vpop.permute.xlu0 %584
        %586 = vrot.lane.b32.xlu0 %v559, 126
        %v587 = vpop.permute.xlu0 %586
        %v588 = vrot.slane %v585, 4
        %v589 = vrot.slane %v587, 4
        %v590 = vsel %vm233, %v588, %v589
        %v591 = vsel %vm248, %v585, %v590
        %594 = vst [vmem:[#allocation2 + $0xc] sm:$0x33] %v591
        %595 = vst.msk [vmem:[#allocation2 + $0x14] sm:$0x3] %vm217, %v587
        %596 = vrot.lane.b32.xlu0 %v571, 110
        %v597 = vpop.permute.xlu0 %596
        %598 = vrot.lane.b32.xlu0 %v552, 110
        %v599 = vpop.permute.xlu0 %598
        %v600 = vrot.slane %v597, 4
        %v601 = vrot.slane %v599, 4
        %v602 = vsel %vm233, %v600, %v601
        %v603 = vsel %vm261, %v597, %v602
        %606 = vst [vmem:[#allocation2 + $0xc] sm:$0xcc] %v603
        %607 = vst.msk [vmem:[#allocation2 + $0x14] sm:$0xc] %vm195, %v599
        %608 = vrot.lane.b32.xlu0 %v552, 109
        %v609 = vpop.permute.xlu0 %608
        %610 = vrot.lane.b32.xlu0 %v559, 109
        %v611 = vpop.permute.xlu0 %610
        %v612 = vrot.slane %v609, 4
        %v613 = vrot.slane %v611, 4
        %v614 = vsel %vm233, %v612, %v613
        %v615 = vsel %vm274, %v609, %v614
        %618 = vst [vmem:[#allocation2 + $0x18] sm:$0x33] %v615
        %619 = vst.msk [vmem:[#allocation2 + $0x20] sm:$0x3] %vm217, %v611
        %620 = vrot.lane.b32.xlu0 %v571, 108
        %v621 = vpop.permute.xlu0 %620
        %622 = vrot.lane.b32.xlu0 %v552, 108
        %v623 = vpop.permute.xlu0 %622
        %v624 = vrot.slane %v621, 4
        %v625 = vrot.slane %v623, 4
        %v626 = vsel %vm233, %v624, %v625
        %v627 = vsel %vm287, %v621, %v626
        %630 = vst [vmem:[#allocation2 + $0x18] sm:$0xcc] %v627
        %631 = vst.msk [vmem:[#allocation2 + $0x20] sm:$0xc] %vm195, %v623
        %632 = vrot.lane.b32.xlu0 %v552, 92
        %v633 = vpop.permute.xlu0 %632
        %634 = vrot.lane.b32.xlu0 %v559, 92
        %v635 = vpop.permute.xlu0 %634
        %v636 = vrot.slane %v633, 4
        %v637 = vrot.slane %v635, 4
        %v638 = vsel %vm233, %v636, %v637
        %v639 = vsel %vm300, %v633, %v638
        %642 = vst [vmem:[#allocation2 + $0x24] sm:$0x33] %v639
        %643 = vst.msk [vmem:[#allocation2 + $0x2c] sm:$0x3] %vm217, %v635
        %644 = vrot.lane.b32.xlu0 %v571, 91
        %v645 = vpop.permute.xlu0 %644
        %646 = vrot.lane.b32.xlu0 %v552, 91
        %v647 = vpop.permute.xlu0 %646
        %v648 = vrot.slane %v645, 4
        %v649 = vrot.slane %v647, 4
        %v650 = vsel %vm233, %v648, %v649
        %v651 = vsel %vm313, %v645, %v650
        %654 = vst [vmem:[#allocation2 + $0x24] sm:$0xcc] %v651
        %655 = vst.msk [vmem:[#allocation2 + $0x2c] sm:$0xc] %vm195, %v647
        %656 = vrot.lane.b32.xlu0 %v552, 90
        %v657 = vpop.permute.xlu0 %656
        %658 = vrot.lane.b32.xlu0 %v559, 90
        %v659 = vpop.permute.xlu0 %658
        %v660 = vrot.slane %v657, 4
        %v661 = vrot.slane %v659, 4
        %v662 = vsel %vm233, %v660, %v661
        %v663 = vsel %vm326, %v657, %v662
        %666 = vst [vmem:[#allocation2 + $0x30] sm:$0x33] %v663
        %667 = vst.msk [vmem:[#allocation2 + $0x38] sm:$0x3] %vm217, %v659
        %s668 = scalar_lea.vmem [#allocation6], 8
        %v669 = vld [vmem:[%s668] sm:$0xf]
        %v670 = vld [vmem:[%s668 + $0x4] sm:$0xf]
        %v671 = vld [vmem:[#allocation2] sm:$0xff]
        %v672 = vld [vmem:[#allocation2 + $0x8] sm:$0xf]
        %v673 = vld [vmem:[#allocation2 + $0xc] sm:$0xff]
        %v674 = vld [vmem:[#allocation2 + $0x14] sm:$0xf]
        %v675 = vld [vmem:[#allocation2 + $0x18] sm:$0xff]
        %v676 = vld [vmem:[#allocation2 + $0x20] sm:$0xf]
        %v677 = vld [vmem:[#allocation2 + $0x24] sm:$0xff]
        %v678 = vld [vmem:[#allocation2 + $0x2c] sm:$0xf]
        %v679 = vld [vmem:[#allocation2 + $0x30] sm:$0xff]
        %v680 = vld [vmem:[#allocation2 + $0x38] sm:$0xf]
        %v683 = vunpack.c.l.b16 %v669
        %v684 = vunpack.c.l.b16 %v670
        %v685 = vpack.c.b16 %v684, %v683
        %v696 = vunpack.c.l.b16 %v671
        %v697 = vunpack.c.h.b16 %v671
        %v698 = vunpack.c.l.b16 %v672
        %v699 = vunpack.c.l.b16 %v673
        %v700 = vunpack.c.h.b16 %v673
        %v701 = vunpack.c.l.b16 %v674
        %v702 = vunpack.c.l.b16 %v675
        %v703 = vunpack.c.h.b16 %v675
        %v704 = vunpack.c.l.b16 %v676
        %v705 = vunpack.c.l.b16 %v677
        %v706 = vunpack.c.h.b16 %v677
        %v707 = vunpack.c.l.b16 %v678
        %v708 = vunpack.c.l.b16 %v679
        %v709 = vunpack.c.h.b16 %v679
        %v710 = vunpack.c.l.b16 %v680
        %v711 = vpack.c.b16 %v699, %v696
        %v712 = vpack.c.b16 %v700, %v697
        %v713 = vpack.c.b16 %v701, %v698
        %v714 = vpack.c.b16 %v705, %v702
        %v715 = vpack.c.b16 %v706, %v703
        %v716 = vpack.c.b16 %v707, %v704
        %v717 = vpack.c.b16 %v708, %v708
        %v718 = vpack.c.b16 %v709, %v709
        %v719 = vpack.c.b16 %v710, %v710
        %v727 = vsel %vm389, %v685, 0
        %v730 = vsel %vm393, %v717, 0
        %v733 = vsel %vm393, %v718, 0
        %v736 = vsel %vm393, %v719, 0
        %738 = vmatprep.subr.bf16.mxu0 0
        %739 = vmatpush1.bf16.msra.mxu0 0
        %740 = vmatprep.subr.bf16.mxu0 0
        %741 = vmatpush1.bf16.msra.mxu0 0
        %742 = vmatprep.subr.bf16.mxu0 0
        %743 = vmatpush1.bf16.msra.mxu0 0
        %744 = vmatprep.subr.bf16.mxu0 0
        %745 = vmatpush1.bf16.msra.mxu0 0
        %746 = vmatprep.subr.bf16.mxu0 0
        %747 = vmatpush1.bf16.msra.mxu0 0
        %748 = vmatprep.subr.bf16.mxu0 %v733
        %749 = vmatpush1.bf16.msra.mxu0 %v730
        %750 = vmatprep.subr.bf16.mxu0 %v715
        %751 = vmatpush1.bf16.msra.mxu0 %v714
        %752 = vmatprep.subr.bf16.mxu0 %v712
        %753 = vmatpush1.bf16.msra.mxu0 %v711
        %754 = vmatprep.subr.bf16.mxu0 0
        %755 = vmatpush2.bf16.msra.mxu0 0
        %756 = vmatprep.subr.bf16.mxu0 0
        %757 = vmatpush2.bf16.msra.mxu0 0
        %758 = vmatprep.subr.bf16.mxu0 0
        %759 = vmatpush2.bf16.msra.mxu0 0
        %760 = vmatprep.subr.bf16.mxu0 0
        %761 = vmatpush2.bf16.msra.mxu0 0
        %762 = vmatprep.subr.bf16.mxu0 0
        %763 = vmatpush2.bf16.msra.mxu0 0
        %764 = vmatprep.subr.bf16.mxu0 0
        %765 = vmatpush2.bf16.msra.mxu0 0
        %766 = vmatprep.subr.bf16.mxu0 0
        %767 = vmatpush2.bf16.msra.mxu0 0
        %768 = vmatprep.subr.bf16.mxu0 0
        %769 = vmatpush2.bf16.msra.mxu0 0
        %770 = vmatprep.mubr.bf16.mxu0 0
        %771 = vmatmul.mubr.bf16.gmra.mxu0 %v727
        %v772 = vpop.f32.mrf.mxu0
        %v773 = vadd.f32 0.0, %v772
        %v774 = vpop.f32.mrf.mxu0
        %v775 = vadd.f32 0.0, %v774
        %v776 = vpop.f32.mrf.mxu0
        %v777 = vadd.f32 0.0, %v776
        %v778 = vpop.f32.mrf.mxu0
        %v779 = vadd.f32 0.0, %v778
        %780 = vdwg.mxu0
        %781 = vmatprep.subr.bf16.mxu0 0
        %782 = vmatpush1.bf16.msra.mxu0 0
        %783 = vmatprep.subr.bf16.mxu0 0
        %784 = vmatpush1.bf16.msra.mxu0 0
        %785 = vmatprep.subr.bf16.mxu0 0
        %786 = vmatpush1.bf16.msra.mxu0 0
        %787 = vmatprep.subr.bf16.mxu0 0
        %788 = vmatpush1.bf16.msra.mxu0 0
        %789 = vmatprep.subr.bf16.mxu0 0
        %790 = vmatpush1.bf16.msra.mxu0 0
        %791 = vmatprep.subr.bf16.mxu0 0
        %792 = vmatpush1.bf16.msra.mxu0 %v736
        %793 = vmatprep.subr.bf16.mxu0 0
        %794 = vmatpush1.bf16.msra.mxu0 %v716
        %795 = vmatprep.subr.bf16.mxu0 0
        %796 = vmatpush1.bf16.msra.mxu0 %v713
        %797 = vmatprep.subr.bf16.mxu0 0
        %798 = vmatpush2.bf16.msra.mxu0 0
        %799 = vmatprep.subr.bf16.mxu0 0
        %800 = vmatpush2.bf16.msra.mxu0 0
        %801 = vmatprep.subr.bf16.mxu0 0
        %802 = vmatpush2.bf16.msra.mxu0 0
        %803 = vmatprep.subr.bf16.mxu0 0
        %804 = vmatpush2.bf16.msra.mxu0 0
        %805 = vmatprep.subr.bf16.mxu0 0
        %806 = vmatpush2.bf16.msra.mxu0 0
        %807 = vmatprep.subr.bf16.mxu0 0
        %808 = vmatpush2.bf16.msra.mxu0 0
        %809 = vmatprep.subr.bf16.mxu0 0
        %810 = vmatpush2.bf16.msra.mxu0 0
        %811 = vmatprep.subr.bf16.mxu0 0
        %812 = vmatpush2.bf16.msra.mxu0 0
        %813 = vmatprep.mubr.bf16.mxu0 0
        %814 = vmatmul.mubr.bf16.gmra.mxu0 %v727
        %v815 = vpop.f32.mrf.mxu0
        %v816 = vadd.f32 0.0, %v815
        %v817 = vpop.f32.mrf.mxu0
        %v818 = vpop.f32.mrf.mxu0
        %v819 = vadd.f32 0.0, %v818
        %v820 = vpop.f32.mrf.mxu0
        %821 = vdwg.mxu0
        %v822 = vadd.f32 %v536, %v773
        %v823 = vadd.f32 %v537, %v775
        %v824 = vadd.f32 %v538, %v816
        %v825 = vadd.f32 %v539, %v777
        %v826 = vadd.f32 %v540, %v779
        %v827 = vadd.f32 %v541, %v819
        %v828 = vmul.f32 %v822, 0.5
        %v829 = vmul.f32 %v823, 0.5
        %v830 = vmul.f32 %v824, 0.5
        %v831 = vmul.f32 %v825, 0.5
        %v832 = vmul.f32 %v826, 0.5
        %v833 = vmul.f32 %v827, 0.5
        %vm834 = vcmp.ge.f32.partialorder %v828, 1.0
        %vm835 = vcmp.ge.f32.partialorder %v829, 1.0
        %vm836 = vcmp.ge.f32.partialorder %v830, 1.0
        %vm837 = vcmp.ge.f32.partialorder %v831, 1.0
        %vm838 = vcmp.ge.f32.partialorder %v832, 1.0
        %vm839 = vcmp.ge.f32.partialorder %v833, 1.0
        %v840 = vsel %vm834, 1, 0
        %v841 = vsel %vm835, 1, 0
        %v842 = vsel %vm836, 1, 0
        %v843 = vsel %vm837, 1, 0
        %v844 = vsel %vm838, 1, 0
        %v845 = vsel %vm839, 1, 0
        %v846 = vcvt.s32.f32 %v840
        %v847 = vcvt.s32.f32 %v841
        %v848 = vcvt.s32.f32 %v842
        %v849 = vcvt.s32.f32 %v843
        %v850 = vcvt.s32.f32 %v844
        %v851 = vcvt.s32.f32 %v845
        %v852 = vpack.c.bf16 %v849, %v846
        %v853 = vpack.c.bf16 %v850, %v847
        %v854 = vpack.c.bf16 %v851, %v848
        %v858 = vunpack.c.l.b16 %v852
        %v859 = vunpack.c.l.b16 %v853
        %v860 = vunpack.c.l.b16 %v854
        %v861 = vunpack.c.h.b16 %v852
        %v862 = vunpack.c.h.b16 %v853
        %v863 = vunpack.c.h.b16 %v854
        %v864 = vpack.c.b16 %v859, %v858
        %v865 = vpack.c.b16 %v860, %v860
        %v866 = vpack.c.b16 %v862, %v861
        %v867 = vpack.c.b16 %v863, %v863
        %s872 = scalar_lea.vmem %s176, 24 [#allocation8]
        %873 = vst [vmem:[%s872] sm:$0xff] %v864
        %874 = vst.msk [vmem:[%s872 + $0x8] sm:$0xf] %vm532, %v865
        %875 = vst [vmem:[%s872 + $0xc] sm:$0xff] %v866
        %876 = vst.msk [vmem:[%s872 + $0x14] sm:$0xf] %vm532, %v867
        %v877 = vsel %vm834, 0.0, %v828
        %v878 = vsel %vm835, 0.0, %v829
        %v879 = vsel %vm836, 0.0, %v830
        %v880 = vsel %vm837, 0.0, %v831
        %v881 = vsel %vm838, 0.0, %v832
        %v882 = vsel %vm839, 0.0, %v833
        %s883 = scalar_lea.vmem %s152, 12 [#allocation3]
        %v884 = vld [vmem:[%s883] sm:$0x3f]
        %v886 = vcombine.high %v884, %v884
        %v888 = vunpack.c.l.s4 1983009808
        %v889 = vunpack.c.0.s8 %v888
        %v890 = vlaneseq
        %v891 = vshrl.u32 %v890, 7
        %v892 = vsub.s32 %v889, %v891
        %v893 = vrot.slane %v884, %v892
        %v895 = vunpack.c.l.s4 1983009808
        %v896 = vunpack.c.0.s8 %v895
        %v897 = vlaneseq
        %v898 = vshrl.u32 %v897, 7
        %v899 = vsub.s32 %v896, %v898
        %v900 = vrot.slane %v886, %v899
        %903 = vst [vmem:[#allocation2] sm:$0x33] %v893
        %904 = vst.msk [vmem:[#allocation2 + $0x8] sm:$0x3] %vm217, %v900
        %v905 = vcombine.low %v884, %v884
        %v907 = vunpack.c.l.s4 1983009808
        %v908 = vunpack.c.0.s8 %v907
        %v909 = vlaneseq
        %v910 = vshrl.u32 %v909, 7
        %v911 = vsub.s32 %v908, %v910
        %v912 = vrot.slane %v905, %v911
        %913 = vrot.lane.b32.xlu0 %v912, 127
        %v914 = vpop.permute.xlu0 %913
        %915 = vrot.lane.b32.xlu0 %v893, 127
        %v916 = vpop.permute.xlu0 %915
        %v917 = vrot.slane %v914, 4
        %v918 = vrot.slane %v916, 4
        %v919 = vsel %vm233, %v917, %v918
        %v920 = vsel %vm235, %v914, %v919
        %923 = vst [vmem:[#allocation2] sm:$0xcc] %v920
        %924 = vst.msk [vmem:[#allocation2 + $0x8] sm:$0xc] %vm195, %v916
        %925 = vrot.lane.b32.xlu0 %v893, 126
        %v926 = vpop.permute.xlu0 %925
        %927 = vrot.lane.b32.xlu0 %v900, 126
        %v928 = vpop.permute.xlu0 %927
        %v929 = vrot.slane %v926, 4
        %v930 = vrot.slane %v928, 4
        %v931 = vsel %vm233, %v929, %v930
        %v932 = vsel %vm248, %v926, %v931
        %935 = vst [vmem:[#allocation2 + $0xc] sm:$0x33] %v932
        %936 = vst.msk [vmem:[#allocation2 + $0x14] sm:$0x3] %vm217, %v928
        %937 = vrot.lane.b32.xlu0 %v912, 110
        %v938 = vpop.permute.xlu0 %937
        %939 = vrot.lane.b32.xlu0 %v893, 110
        %v940 = vpop.permute.xlu0 %939
        %v941 = vrot.slane %v938, 4
        %v942 = vrot.slane %v940, 4
        %v943 = vsel %vm233, %v941, %v942
        %v944 = vsel %vm261, %v938, %v943
        %947 = vst [vmem:[#allocation2 + $0xc] sm:$0xcc] %v944
        %948 = vst.msk [vmem:[#allocation2 + $0x14] sm:$0xc] %vm195, %v940
        %949 = vrot.lane.b32.xlu0 %v893, 109
        %v950 = vpop.permute.xlu0 %949
        %951 = vrot.lane.b32.xlu0 %v900, 109
        %v952 = vpop.permute.xlu0 %951
        %v953 = vrot.slane %v950, 4
        %v954 = vrot.slane %v952, 4
        %v955 = vsel %vm233, %v953, %v954
        %v956 = vsel %vm274, %v950, %v955
        %959 = vst [vmem:[#allocation2 + $0x18] sm:$0x33] %v956
        %960 = vst.msk [vmem:[#allocation2 + $0x20] sm:$0x3] %vm217, %v952
        %961 = vrot.lane.b32.xlu0 %v912, 108
        %v962 = vpop.permute.xlu0 %961
        %963 = vrot.lane.b32.xlu0 %v893, 108
        %v964 = vpop.permute.xlu0 %963
        %v965 = vrot.slane %v962, 4
        %v966 = vrot.slane %v964, 4
        %v967 = vsel %vm233, %v965, %v966
        %v968 = vsel %vm287, %v962, %v967
        %971 = vst [vmem:[#allocation2 + $0x18] sm:$0xcc] %v968
        %972 = vst.msk [vmem:[#allocation2 + $0x20] sm:$0xc] %vm195, %v964
        %973 = vrot.lane.b32.xlu0 %v893, 92
        %v974 = vpop.permute.xlu0 %973
        %975 = vrot.lane.b32.xlu0 %v900, 92
        %v976 = vpop.permute.xlu0 %975
        %v977 = vrot.slane %v974, 4
        %v978 = vrot.slane %v976, 4
        %v979 = vsel %vm233, %v977, %v978
        %v980 = vsel %vm300, %v974, %v979
        %983 = vst [vmem:[#allocation2 + $0x24] sm:$0x33] %v980
        %984 = vst.msk [vmem:[#allocation2 + $0x2c] sm:$0x3] %vm217, %v976
        %985 = vrot.lane.b32.xlu0 %v912, 91
        %v986 = vpop.permute.xlu0 %985
        %987 = vrot.lane.b32.xlu0 %v893, 91
        %v988 = vpop.permute.xlu0 %987
        %v989 = vrot.slane %v986, 4
        %v990 = vrot.slane %v988, 4
        %v991 = vsel %vm233, %v989, %v990
        %v992 = vsel %vm313, %v986, %v991
        %995 = vst [vmem:[#allocation2 + $0x24] sm:$0xcc] %v992
        %996 = vst.msk [vmem:[#allocation2 + $0x2c] sm:$0xc] %vm195, %v988
        %997 = vrot.lane.b32.xlu0 %v893, 90
        %v998 = vpop.permute.xlu0 %997
        %999 = vrot.lane.b32.xlu0 %v900, 90
        %v1000 = vpop.permute.xlu0 %999
        %v1001 = vrot.slane %v998, 4
        %v1002 = vrot.slane %v1000, 4
        %v1003 = vsel %vm233, %v1001, %v1002
        %v1004 = vsel %vm326, %v998, %v1003
        %1007 = vst [vmem:[#allocation2 + $0x30] sm:$0x33] %v1004
        %1008 = vst.msk [vmem:[#allocation2 + $0x38] sm:$0x3] %vm217, %v1000
        %s1009 = scalar_lea.vmem [#allocation6], 16
        %v1010 = vld [vmem:[%s1009] sm:$0xf]
        %v1011 = vld [vmem:[%s1009 + $0x4] sm:$0xf]
        %v1012 = vld [vmem:[#allocation2] sm:$0xff]
        %v1013 = vld [vmem:[#allocation2 + $0x8] sm:$0xf]
        %v1014 = vld [vmem:[#allocation2 + $0xc] sm:$0xff]
        %v1015 = vld [vmem:[#allocation2 + $0x14] sm:$0xf]
        %v1016 = vld [vmem:[#allocation2 + $0x18] sm:$0xff]
        %v1017 = vld [vmem:[#allocation2 + $0x20] sm:$0xf]
        %v1018 = vld [vmem:[#allocation2 + $0x24] sm:$0xff]
        %v1019 = vld [vmem:[#allocation2 + $0x2c] sm:$0xf]
        %v1020 = vld [vmem:[#allocation2 + $0x30] sm:$0xff]
        %v1021 = vld [vmem:[#allocation2 + $0x38] sm:$0xf]
        %v1024 = vunpack.c.l.b16 %v1010
        %v1025 = vunpack.c.l.b16 %v1011
        %v1026 = vpack.c.b16 %v1025, %v1024
        %v1037 = vunpack.c.l.b16 %v1012
        %v1038 = vunpack.c.h.b16 %v1012
        %v1039 = vunpack.c.l.b16 %v1013
        %v1040 = vunpack.c.l.b16 %v1014
        %v1041 = vunpack.c.h.b16 %v1014
        %v1042 = vunpack.c.l.b16 %v1015
        %v1043 = vunpack.c.l.b16 %v1016
        %v1044 = vunpack.c.h.b16 %v1016
        %v1045 = vunpack.c.l.b16 %v1017
        %v1046 = vunpack.c.l.b16 %v1018
        %v1047 = vunpack.c.h.b16 %v1018
        %v1048 = vunpack.c.l.b16 %v1019
        %v1049 = vunpack.c.l.b16 %v1020
        %v1050 = vunpack.c.h.b16 %v1020
        %v1051 = vunpack.c.l.b16 %v1021
        %v1052 = vpack.c.b16 %v1040, %v1037
        %v1053 = vpack.c.b16 %v1041, %v1038
        %v1054 = vpack.c.b16 %v1042, %v1039
        %v1055 = vpack.c.b16 %v1046, %v1043
        %v1056 = vpack.c.b16 %v1047, %v1044
        %v1057 = vpack.c.b16 %v1048, %v1045
        %v1058 = vpack.c.b16 %v1049, %v1049
        %v1059 = vpack.c.b16 %v1050, %v1050
        %v1060 = vpack.c.b16 %v1051, %v1051
        %v1068 = vsel %vm389, %v1026, 0
        %v1071 = vsel %vm393, %v1058, 0
        %v1074 = vsel %vm393, %v1059, 0
        %v1077 = vsel %vm393, %v1060, 0
        %1079 = vmatprep.subr.bf16.mxu0 0
        %1080 = vmatpush1.bf16.msra.mxu0 0
        %1081 = vmatprep.subr.bf16.mxu0 0
        %1082 = vmatpush1.bf16.msra.mxu0 0
        %1083 = vmatprep.subr.bf16.mxu0 0
        %1084 = vmatpush1.bf16.msra.mxu0 0
        %1085 = vmatprep.subr.bf16.mxu0 0
        %1086 = vmatpush1.bf16.msra.mxu0 0
        %1087 = vmatprep.subr.bf16.mxu0 0
        %1088 = vmatpush1.bf16.msra.mxu0 0
        %1089 = vmatprep.subr.bf16.mxu0 %v1074
        %1090 = vmatpush1.bf16.msra.mxu0 %v1071
        %1091 = vmatprep.subr.bf16.mxu0 %v1056
        %1092 = vmatpush1.bf16.msra.mxu0 %v1055
        %1093 = vmatprep.subr.bf16.mxu0 %v1053
        %1094 = vmatpush1.bf16.msra.mxu0 %v1052
        %1095 = vmatprep.subr.bf16.mxu0 0
        %1096 = vmatpush2.bf16.msra.mxu0 0
        %1097 = vmatprep.subr.bf16.mxu0 0
        %1098 = vmatpush2.bf16.msra.mxu0 0
        %1099 = vmatprep.subr.bf16.mxu0 0
        %1100 = vmatpush2.bf16.msra.mxu0 0
        %1101 = vmatprep.subr.bf16.mxu0 0
        %1102 = vmatpush2.bf16.msra.mxu0 0
        %1103 = vmatprep.subr.bf16.mxu0 0
        %1104 = vmatpush2.bf16.msra.mxu0 0
        %1105 = vmatprep.subr.bf16.mxu0 0
        %1106 = vmatpush2.bf16.msra.mxu0 0
        %1107 = vmatprep.subr.bf16.mxu0 0
        %1108 = vmatpush2.bf16.msra.mxu0 0
        %1109 = vmatprep.subr.bf16.mxu0 0
        %1110 = vmatpush2.bf16.msra.mxu0 0
        %1111 = vmatprep.mubr.bf16.mxu0 0
        %1112 = vmatmul.mubr.bf16.gmra.mxu0 %v1068
        %v1113 = vpop.f32.mrf.mxu0
        %v1114 = vadd.f32 0.0, %v1113
        %v1115 = vpop.f32.mrf.mxu0
        %v1116 = vadd.f32 0.0, %v1115
        %v1117 = vpop.f32.mrf.mxu0
        %v1118 = vadd.f32 0.0, %v1117
        %v1119 = vpop.f32.mrf.mxu0
        %v1120 = vadd.f32 0.0, %v1119
        %1121 = vdwg.mxu0
        %1122 = vmatprep.subr.bf16.mxu0 0
        %1123 = vmatpush1.bf16.msra.mxu0 0
        %1124 = vmatprep.subr.bf16.mxu0 0
        %1125 = vmatpush1.bf16.msra.mxu0 0
        %1126 = vmatprep.subr.bf16.mxu0 0
        %1127 = vmatpush1.bf16.msra.mxu0 0
        %1128 = vmatprep.subr.bf16.mxu0 0
        %1129 = vmatpush1.bf16.msra.mxu0 0
        %1130 = vmatprep.subr.bf16.mxu0 0
        %1131 = vmatpush1.bf16.msra.mxu0 0
        %1132 = vmatprep.subr.bf16.mxu0 0
        %1133 = vmatpush1.bf16.msra.mxu0 %v1077
        %1134 = vmatprep.subr.bf16.mxu0 0
        %1135 = vmatpush1.bf16.msra.mxu0 %v1057
        %1136 = vmatprep.subr.bf16.mxu0 0
        %1137 = vmatpush1.bf16.msra.mxu0 %v1054
        %1138 = vmatprep.subr.bf16.mxu0 0
        %1139 = vmatpush2.bf16.msra.mxu0 0
        %1140 = vmatprep.subr.bf16.mxu0 0
        %1141 = vmatpush2.bf16.msra.mxu0 0
        %1142 = vmatprep.subr.bf16.mxu0 0
        %1143 = vmatpush2.bf16.msra.mxu0 0
        %1144 = vmatprep.subr.bf16.mxu0 0
        %1145 = vmatpush2.bf16.msra.mxu0 0
        %1146 = vmatprep.subr.bf16.mxu0 0
        %1147 = vmatpush2.bf16.msra.mxu0 0
        %1148 = vmatprep.subr.bf16.mxu0 0
        %1149 = vmatpush2.bf16.msra.mxu0 0
        %1150 = vmatprep.subr.bf16.mxu0 0
        %1151 = vmatpush2.bf16.msra.mxu0 0
        %1152 = vmatprep.subr.bf16.mxu0 0
        %1153 = vmatpush2.bf16.msra.mxu0 0
        %1154 = vmatprep.mubr.bf16.mxu0 0
        %1155 = vmatmul.mubr.bf16.gmra.mxu0 %v1068
        %v1156 = vpop.f32.mrf.mxu0
        %v1157 = vadd.f32 0.0, %v1156
        %v1158 = vpop.f32.mrf.mxu0
        %v1159 = vpop.f32.mrf.mxu0
        %v1160 = vadd.f32 0.0, %v1159
        %v1161 = vpop.f32.mrf.mxu0
        %1162 = vdwg.mxu0
        %v1163 = vadd.f32 %v877, %v1114
        %v1164 = vadd.f32 %v878, %v1116
        %v1165 = vadd.f32 %v879, %v1157
        %v1166 = vadd.f32 %v880, %v1118
        %v1167 = vadd.f32 %v881, %v1120
        %v1168 = vadd.f32 %v882, %v1160
        %v1169 = vmul.f32 %v1163, 0.5
        %v1170 = vmul.f32 %v1164, 0.5
        %v1171 = vmul.f32 %v1165, 0.5
        %v1172 = vmul.f32 %v1166, 0.5
        %v1173 = vmul.f32 %v1167, 0.5
        %v1174 = vmul.f32 %v1168, 0.5
        %vm1175 = vcmp.ge.f32.partialorder %v1169, 1.0
        %vm1176 = vcmp.ge.f32.partialorder %v1170, 1.0
        %vm1177 = vcmp.ge.f32.partialorder %v1171, 1.0
        %vm1178 = vcmp.ge.f32.partialorder %v1172, 1.0
        %vm1179 = vcmp.ge.f32.partialorder %v1173, 1.0
        %vm1180 = vcmp.ge.f32.partialorder %v1174, 1.0
        %v1181 = vsel %vm1175, 1, 0
        %v1182 = vsel %vm1176, 1, 0
        %v1183 = vsel %vm1177, 1, 0
        %v1184 = vsel %vm1178, 1, 0
        %v1185 = vsel %vm1179, 1, 0
        %v1186 = vsel %vm1180, 1, 0
        %v1187 = vcvt.s32.f32 %v1181
        %v1188 = vcvt.s32.f32 %v1182
        %v1189 = vcvt.s32.f32 %v1183
        %v1190 = vcvt.s32.f32 %v1184
        %v1191 = vcvt.s32.f32 %v1185
        %v1192 = vcvt.s32.f32 %v1186
        %v1193 = vpack.c.bf16 %v1190, %v1187
        %v1194 = vpack.c.bf16 %v1191, %v1188
        %v1195 = vpack.c.bf16 %v1192, %v1189
        %v1199 = vunpack.c.l.b16 %v1193
        %v1200 = vunpack.c.l.b16 %v1194
        %v1201 = vunpack.c.l.b16 %v1195
        %v1202 = vunpack.c.h.b16 %v1193
        %v1203 = vunpack.c.h.b16 %v1194
        %v1204 = vunpack.c.h.b16 %v1195
        %v1205 = vpack.c.b16 %v1200, %v1199
        %v1206 = vpack.c.b16 %v1201, %v1201
        %v1207 = vpack.c.b16 %v1203, %v1202
        %v1208 = vpack.c.b16 %v1204, %v1204
        %s1213 = scalar_lea.vmem %s176, 48 [#allocation8]
        %1214 = vst [vmem:[%s1213] sm:$0xff] %v1205
        %1215 = vst.msk [vmem:[%s1213 + $0x8] sm:$0xf] %vm532, %v1206
        %1216 = vst [vmem:[%s1213 + $0xc] sm:$0xff] %v1207
        %1217 = vst.msk [vmem:[%s1213 + $0x14] sm:$0xf] %vm532, %v1208
        %v1218 = vsel %vm1175, 0.0, %v1169
        %v1219 = vsel %vm1176, 0.0, %v1170
        %v1220 = vsel %vm1177, 0.0, %v1171
        %v1221 = vsel %vm1178, 0.0, %v1172
        %v1222 = vsel %vm1179, 0.0, %v1173
        %v1223 = vsel %vm1180, 0.0, %v1174
        %s1224 = scalar_lea.vmem %s152, 18 [#allocation3]
        %v1225 = vld [vmem:[%s1224] sm:$0x3f]
        %v1227 = vcombine.high %v1225, %v1225
        %v1229 = vunpack.c.l.s4 1983009808
        %v1230 = vunpack.c.0.s8 %v1229
        %v1231 = vlaneseq
        %v1232 = vshrl.u32 %v1231, 7
        %v1233 = vsub.s32 %v1230, %v1232
        %v1234 = vrot.slane %v1225, %v1233
        %v1236 = vunpack.c.l.s4 1983009808
        %v1237 = vunpack.c.0.s8 %v1236
        %v1238 = vlaneseq
        %v1239 = vshrl.u32 %v1238, 7
        %v1240 = vsub.s32 %v1237, %v1239
        %v1241 = vrot.slane %v1227, %v1240
        %1244 = vst [vmem:[#allocation2] sm:$0x33] %v1234
        %1245 = vst.msk [vmem:[#allocation2 + $0x8] sm:$0x3] %vm217, %v1241
        %v1246 = vcombine.low %v1225, %v1225
        %v1248 = vunpack.c.l.s4 1983009808
        %v1249 = vunpack.c.0.s8 %v1248
        %v1250 = vlaneseq
        %v1251 = vshrl.u32 %v1250, 7
        %v1252 = vsub.s32 %v1249, %v1251
        %v1253 = vrot.slane %v1246, %v1252
        %1254 = vrot.lane.b32.xlu0 %v1253, 127
        %v1255 = vpop.permute.xlu0 %1254
        %1256 = vrot.lane.b32.xlu0 %v1234, 127
        %v1257 = vpop.permute.xlu0 %1256
        %v1258 = vrot.slane %v1255, 4
        %v1259 = vrot.slane %v1257, 4
        %v1260 = vsel %vm233, %v1258, %v1259
        %v1261 = vsel %vm235, %v1255, %v1260
        %1264 = vst [vmem:[#allocation2] sm:$0xcc] %v1261
        %1265 = vst.msk [vmem:[#allocation2 + $0x8] sm:$0xc] %vm195, %v1257
        %1266 = vrot.lane.b32.xlu0 %v1234, 126
        %v1267 = vpop.permute.xlu0 %1266
        %1268 = vrot.lane.b32.xlu0 %v1241, 126
        %v1269 = vpop.permute.xlu0 %1268
        %v1270 = vrot.slane %v1267, 4
        %v1271 = vrot.slane %v1269, 4
        %v1272 = vsel %vm233, %v1270, %v1271
        %v1273 = vsel %vm248, %v1267, %v1272
        %1276 = vst [vmem:[#allocation2 + $0xc] sm:$0x33] %v1273
        %1277 = vst.msk [vmem:[#allocation2 + $0x14] sm:$0x3] %vm217, %v1269
        %1278 = vrot.lane.b32.xlu0 %v1253, 110
        %v1279 = vpop.permute.xlu0 %1278
        %1280 = vrot.lane.b32.xlu0 %v1234, 110
        %v1281 = vpop.permute.xlu0 %1280
        %v1282 = vrot.slane %v1279, 4
        %v1283 = vrot.slane %v1281, 4
        %v1284 = vsel %vm233, %v1282, %v1283
        %v1285 = vsel %vm261, %v1279, %v1284
        %1288 = vst [vmem:[#allocation2 + $0xc] sm:$0xcc] %v1285
        %1289 = vst.msk [vmem:[#allocation2 + $0x14] sm:$0xc] %vm195, %v1281
        %1290 = vrot.lane.b32.xlu0 %v1234, 109
        %v1291 = vpop.permute.xlu0 %1290
        %1292 = vrot.lane.b32.xlu0 %v1241, 109
        %v1293 = vpop.permute.xlu0 %1292
        %v1294 = vrot.slane %v1291, 4
        %v1295 = vrot.slane %v1293, 4
        %v1296 = vsel %vm233, %v1294, %v1295
        %v1297 = vsel %vm274, %v1291, %v1296
        %1300 = vst [vmem:[#allocation2 + $0x18] sm:$0x33] %v1297
        %1301 = vst.msk [vmem:[#allocation2 + $0x20] sm:$0x3] %vm217, %v1293
        %1302 = vrot.lane.b32.xlu0 %v1253, 108
        %v1303 = vpop.permute.xlu0 %1302
        %1304 = vrot.lane.b32.xlu0 %v1234, 108
        %v1305 = vpop.permute.xlu0 %1304
        %v1306 = vrot.slane %v1303, 4
        %v1307 = vrot.slane %v1305, 4
        %v1308 = vsel %vm233, %v1306, %v1307
        %v1309 = vsel %vm287, %v1303, %v1308
        %1312 = vst [vmem:[#allocation2 + $0x18] sm:$0xcc] %v1309
        %1313 = vst.msk [vmem:[#allocation2 + $0x20] sm:$0xc] %vm195, %v1305
        %1314 = vrot.lane.b32.xlu0 %v1234, 92
        %v1315 = vpop.permute.xlu0 %1314
        %1316 = vrot.lane.b32.xlu0 %v1241, 92
        %v1317 = vpop.permute.xlu0 %1316
        %v1318 = vrot.slane %v1315, 4
        %v1319 = vrot.slane %v1317, 4
        %v1320 = vsel %vm233, %v1318, %v1319
        %v1321 = vsel %vm300, %v1315, %v1320
        %1324 = vst [vmem:[#allocation2 + $0x24] sm:$0x33] %v1321
        %1325 = vst.msk [vmem:[#allocation2 + $0x2c] sm:$0x3] %vm217, %v1317
        %1326 = vrot.lane.b32.xlu0 %v1253, 91
        %v1327 = vpop.permute.xlu0 %1326
        %1328 = vrot.lane.b32.xlu0 %v1234, 91
        %v1329 = vpop.permute.xlu0 %1328
        %v1330 = vrot.slane %v1327, 4
        %v1331 = vrot.slane %v1329, 4
        %v1332 = vsel %vm233, %v1330, %v1331
        %v1333 = vsel %vm313, %v1327, %v1332
        %1336 = vst [vmem:[#allocation2 + $0x24] sm:$0xcc] %v1333
        %1337 = vst.msk [vmem:[#allocation2 + $0x2c] sm:$0xc] %vm195, %v1329
        %1338 = vrot.lane.b32.xlu0 %v1234, 90
        %v1339 = vpop.permute.xlu0 %1338
        %1340 = vrot.lane.b32.xlu0 %v1241, 90
        %v1341 = vpop.permute.xlu0 %1340
        %v1342 = vrot.slane %v1339, 4
        %v1343 = vrot.slane %v1341, 4
        %v1344 = vsel %vm233, %v1342, %v1343
        %v1345 = vsel %vm326, %v1339, %v1344
        %1348 = vst [vmem:[#allocation2 + $0x30] sm:$0x33] %v1345
        %1349 = vst.msk [vmem:[#allocation2 + $0x38] sm:$0x3] %vm217, %v1341
        %s1350 = scalar_lea.vmem [#allocation6], 24
        %v1351 = vld [vmem:[%s1350] sm:$0xf]
        %v1352 = vld [vmem:[%s1350 + $0x4] sm:$0xf]
        %v1353 = vld [vmem:[#allocation2] sm:$0xff]
        %v1354 = vld [vmem:[#allocation2 + $0x8] sm:$0xf]
        %v1355 = vld [vmem:[#allocation2 + $0xc] sm:$0xff]
        %v1356 = vld [vmem:[#allocation2 + $0x14] sm:$0xf]
        %v1357 = vld [vmem:[#allocation2 + $0x18] sm:$0xff]
        %v1358 = vld [vmem:[#allocation2 + $0x20] sm:$0xf]
        %v1359 = vld [vmem:[#allocation2 + $0x24] sm:$0xff]
        %v1360 = vld [vmem:[#allocation2 + $0x2c] sm:$0xf]
        %v1361 = vld [vmem:[#allocation2 + $0x30] sm:$0xff]
        %v1362 = vld [vmem:[#allocation2 + $0x38] sm:$0xf]
        %v1365 = vunpack.c.l.b16 %v1351
        %v1366 = vunpack.c.l.b16 %v1352
        %v1367 = vpack.c.b16 %v1366, %v1365
        %v1378 = vunpack.c.l.b16 %v1353
        %v1379 = vunpack.c.h.b16 %v1353
        %v1380 = vunpack.c.l.b16 %v1354
        %v1381 = vunpack.c.l.b16 %v1355
        %v1382 = vunpack.c.h.b16 %v1355
        %v1383 = vunpack.c.l.b16 %v1356
        %v1384 = vunpack.c.l.b16 %v1357
        %v1385 = vunpack.c.h.b16 %v1357
        %v1386 = vunpack.c.l.b16 %v1358
        %v1387 = vunpack.c.l.b16 %v1359
        %v1388 = vunpack.c.h.b16 %v1359
        %v1389 = vunpack.c.l.b16 %v1360
        %v1390 = vunpack.c.l.b16 %v1361
        %v1391 = vunpack.c.h.b16 %v1361
        %v1392 = vunpack.c.l.b16 %v1362
        %v1393 = vpack.c.b16 %v1381, %v1378
        %v1394 = vpack.c.b16 %v1382, %v1379
        %v1395 = vpack.c.b16 %v1383, %v1380
        %v1396 = vpack.c.b16 %v1387, %v1384
        %v1397 = vpack.c.b16 %v1388, %v1385
        %v1398 = vpack.c.b16 %v1389, %v1386
        %v1399 = vpack.c.b16 %v1390, %v1390
        %v1400 = vpack.c.b16 %v1391, %v1391
        %v1401 = vpack.c.b16 %v1392, %v1392
        %v1409 = vsel %vm389, %v1367, 0
        %v1412 = vsel %vm393, %v1399, 0
        %v1415 = vsel %vm393, %v1400, 0
        %v1418 = vsel %vm393, %v1401, 0
        %1420 = vmatprep.subr.bf16.mxu0 0
        %1421 = vmatpush1.bf16.msra.mxu0 0
        %1422 = vmatprep.subr.bf16.mxu0 0
        %1423 = vmatpush1.bf16.msra.mxu0 0
        %1424 = vmatprep.subr.bf16.mxu0 0
        %1425 = vmatpush1.bf16.msra.mxu0 0
        %1426 = vmatprep.subr.bf16.mxu0 0
        %1427 = vmatpush1.bf16.msra.mxu0 0
        %1428 = vmatprep.subr.bf16.mxu0 0
        %1429 = vmatpush1.bf16.msra.mxu0 0
        %1430 = vmatprep.subr.bf16.mxu0 %v1415
        %1431 = vmatpush1.bf16.msra.mxu0 %v1412
        %1432 = vmatprep.subr.bf16.mxu0 %v1397
        %1433 = vmatpush1.bf16.msra.mxu0 %v1396
        %1434 = vmatprep.subr.bf16.mxu0 %v1394
        %1435 = vmatpush1.bf16.msra.mxu0 %v1393
        %1436 = vmatprep.subr.bf16.mxu0 0
        %1437 = vmatpush2.bf16.msra.mxu0 0
        %1438 = vmatprep.subr.bf16.mxu0 0
        %1439 = vmatpush2.bf16.msra.mxu0 0
        %1440 = vmatprep.subr.bf16.mxu0 0
        %1441 = vmatpush2.bf16.msra.mxu0 0
        %1442 = vmatprep.subr.bf16.mxu0 0
        %1443 = vmatpush2.bf16.msra.mxu0 0
        %1444 = vmatprep.subr.bf16.mxu0 0
        %1445 = vmatpush2.bf16.msra.mxu0 0
        %1446 = vmatprep.subr.bf16.mxu0 0
        %1447 = vmatpush2.bf16.msra.mxu0 0
        %1448 = vmatprep.subr.bf16.mxu0 0
        %1449 = vmatpush2.bf16.msra.mxu0 0
        %1450 = vmatprep.subr.bf16.mxu0 0
        %1451 = vmatpush2.bf16.msra.mxu0 0
        %1452 = vmatprep.mubr.bf16.mxu0 0
        %1453 = vmatmul.mubr.bf16.gmra.mxu0 %v1409
        %v1454 = vpop.f32.mrf.mxu0
        %v1455 = vadd.f32 0.0, %v1454
        %v1456 = vpop.f32.mrf.mxu0
        %v1457 = vadd.f32 0.0, %v1456
        %v1458 = vpop.f32.mrf.mxu0
        %v1459 = vadd.f32 0.0, %v1458
        %v1460 = vpop.f32.mrf.mxu0
        %v1461 = vadd.f32 0.0, %v1460
        %1462 = vdwg.mxu0
        %1463 = vmatprep.subr.bf16.mxu0 0
        %1464 = vmatpush1.bf16.msra.mxu0 0
        %1465 = vmatprep.subr.bf16.mxu0 0
        %1466 = vmatpush1.bf16.msra.mxu0 0
        %1467 = vmatprep.subr.bf16.mxu0 0
        %1468 = vmatpush1.bf16.msra.mxu0 0
        %1469 = vmatprep.subr.bf16.mxu0 0
        %1470 = vmatpush1.bf16.msra.mxu0 0
        %1471 = vmatprep.subr.bf16.mxu0 0
        %1472 = vmatpush1.bf16.msra.mxu0 0
        %1473 = vmatprep.subr.bf16.mxu0 0
        %1474 = vmatpush1.bf16.msra.mxu0 %v1418
        %1475 = vmatprep.subr.bf16.mxu0 0
        %1476 = vmatpush1.bf16.msra.mxu0 %v1398
        %1477 = vmatprep.subr.bf16.mxu0 0
        %1478 = vmatpush1.bf16.msra.mxu0 %v1395
        %1479 = vmatprep.subr.bf16.mxu0 0
        %1480 = vmatpush2.bf16.msra.mxu0 0
        %1481 = vmatprep.subr.bf16.mxu0 0
        %1482 = vmatpush2.bf16.msra.mxu0 0
        %1483 = vmatprep.subr.bf16.mxu0 0
        %1484 = vmatpush2.bf16.msra.mxu0 0
        %1485 = vmatprep.subr.bf16.mxu0 0
        %1486 = vmatpush2.bf16.msra.mxu0 0
        %1487 = vmatprep.subr.bf16.mxu0 0
        %1488 = vmatpush2.bf16.msra.mxu0 0
        %1489 = vmatprep.subr.bf16.mxu0 0
        %1490 = vmatpush2.bf16.msra.mxu0 0
        %1491 = vmatprep.subr.bf16.mxu0 0
        %1492 = vmatpush2.bf16.msra.mxu0 0
        %1493 = vmatprep.subr.bf16.mxu0 0
        %1494 = vmatpush2.bf16.msra.mxu0 0
        %1495 = vmatprep.mubr.bf16.mxu0 0
        %1496 = vmatmul.mubr.bf16.gmra.mxu0 %v1409
        %v1497 = vpop.f32.mrf.mxu0
        %v1498 = vadd.f32 0.0, %v1497
        %v1499 = vpop.f32.mrf.mxu0
        %v1500 = vpop.f32.mrf.mxu0
        %v1501 = vadd.f32 0.0, %v1500
        %v1502 = vpop.f32.mrf.mxu0
        %1503 = vdwg.mxu0
        %v1504 = vadd.f32 %v1218, %v1455
        %v1505 = vadd.f32 %v1219, %v1457
        %v1506 = vadd.f32 %v1220, %v1498
        %v1507 = vadd.f32 %v1221, %v1459
        %v1508 = vadd.f32 %v1222, %v1461
        %v1509 = vadd.f32 %v1223, %v1501
        %v1510 = vmul.f32 %v1504, 0.5
        %v1511 = vmul.f32 %v1505, 0.5
        %v1512 = vmul.f32 %v1506, 0.5
        %v1513 = vmul.f32 %v1507, 0.5
        %v1514 = vmul.f32 %v1508, 0.5
        %v1515 = vmul.f32 %v1509, 0.5
        %vm1516 = vcmp.ge.f32.partialorder %v1510, 1.0
        %vm1517 = vcmp.ge.f32.partialorder %v1511, 1.0
        %vm1518 = vcmp.ge.f32.partialorder %v1512, 1.0
        %vm1519 = vcmp.ge.f32.partialorder %v1513, 1.0
        %vm1520 = vcmp.ge.f32.partialorder %v1514, 1.0
        %vm1521 = vcmp.ge.f32.partialorder %v1515, 1.0
        %v1522 = vsel %vm1516, 1, 0
        %v1523 = vsel %vm1517, 1, 0
        %v1524 = vsel %vm1518, 1, 0
        %v1525 = vsel %vm1519, 1, 0
        %v1526 = vsel %vm1520, 1, 0
        %v1527 = vsel %vm1521, 1, 0
        %v1528 = vcvt.s32.f32 %v1522
        %v1529 = vcvt.s32.f32 %v1523
        %v1530 = vcvt.s32.f32 %v1524
        %v1531 = vcvt.s32.f32 %v1525
        %v1532 = vcvt.s32.f32 %v1526
        %v1533 = vcvt.s32.f32 %v1527
        %v1534 = vpack.c.bf16 %v1531, %v1528
        %v1535 = vpack.c.bf16 %v1532, %v1529
        %v1536 = vpack.c.bf16 %v1533, %v1530
        %v1540 = vunpack.c.l.b16 %v1534
        %v1541 = vunpack.c.l.b16 %v1535
        %v1542 = vunpack.c.l.b16 %v1536
        %v1543 = vunpack.c.h.b16 %v1534
        %v1544 = vunpack.c.h.b16 %v1535
        %v1545 = vunpack.c.h.b16 %v1536
        %v1546 = vpack.c.b16 %v1541, %v1540
        %v1547 = vpack.c.b16 %v1542, %v1542
        %v1548 = vpack.c.b16 %v1544, %v1543
        %v1549 = vpack.c.b16 %v1545, %v1545
        %s1554 = scalar_lea.vmem %s176, 72 [#allocation8]
        %1555 = vst [vmem:[%s1554] sm:$0xff] %v1546
        %1556 = vst.msk [vmem:[%s1554 + $0x8] sm:$0xf] %vm532, %v1547
        %1557 = vst [vmem:[%s1554 + $0xc] sm:$0xff] %v1548
        %1558 = vst.msk [vmem:[%s1554 + $0x14] sm:$0xf] %vm532, %v1549
        %s1559 = sand.u32 %s75, 1
        %s1560 = scalar_lea.sflag [#allocation5], %s1559
        %s1561 = sand.u32 %s75, 1
        %s1562 = smul.addr %s1561, 96
        %s1563 = scalar_lea.vmem [#allocation8], %s1562
        // Predicated region
        $region37: #{tpu_custom_call.1} parent=27 // pred_check
          %p1564 = pneg %p85
        $region38: #{tpu_custom_call.1} parent=27 // pred_check_branch
          %1566 = sbr.rel (%p1564) target = $region40
        $region39: #{tpu_custom_call.1} parent=27 // pred_region
          #allocation10 [shape = 'u32[6]{0}', space=smem, size = 0x18, scoped, tag = 'DMA stride descriptor']
          %s1568 = ssub.s32 1536, 1536
          %1569 = vsyncadd %s1560, %s1568
          %s1570 = smul.addr %s20, 6
          %s1571 = smul.addr %s1570, 64
          %s1572 = scalar_lea.hbm %s2, %s1571
          %s1574 = sshll.u32 1, 14
          %s1575 = sxor.u32 4294967295, %s1574
          %s1578 = sshll.u32 7, 18
          %s1579 = sxor.u32 4294967295, %s1578
          %s1580 = sand.u32 0, %s1579
          %s1582 = sor.u32 %s1580, 0
          %s1583 = sshll.u32 %s1563, 4
          %s1584 = int_to_ptr.vmem [resolvable:$true] %s1583
          %1590 = sst [smem:[#allocation10]] 384
          %s1591 = scalar_lea.smem [#allocation10], 1
          %1592 = sst [smem:[%s1591]] 768
          %s1593 = scalar_lea.smem [#allocation10], 2
          %1594 = sst [smem:[%s1593]] 2
          %s1595 = scalar_lea.smem [#allocation10], 3
          %1596 = sst [smem:[%s1595]] 192
          %s1597 = scalar_lea.smem [#allocation10], 4
          %1598 = sst [smem:[%s1597]] 192
          %s1599 = scalar_lea.smem [#allocation10], 5
          %1600 = sst [smem:[%s1599]] 12
          %1602 = dma.general %s1584, 1536, %s1572, %s1560, 131072, [#allocation10], %s1582, 0
        $region40: #{tpu_custom_call.1} parent=27 // pred_fallthru
          _
      $region28: #{tpu_custom_call.1} parent=5 // pred_fallthru
        _
      %p1603 = scmp.le.s32.totalorder 2, %s15
      // Predicated region
      $region41: #{tpu_custom_call.1} parent=5 // pred_check
        %p1604 = pneg %p1603
      $region42: #{tpu_custom_call.1} parent=5 // pred_check_branch
        %1606 = sbr.rel (%p1604) target = $region44
      $region43: #{tpu_custom_call.1} parent=5 // pred_region
        %s1607 = ssub.s32 %s15, 2
        // Predicated region
        $region45: #{tpu_custom_call.1} parent=43 // pred_check
          %p1608 = pneg %p91
        $region46: #{tpu_custom_call.1} parent=43 // pred_check_branch
          %1610 = sbr.rel (%p1608) target = $region48
        $region47: #{tpu_custom_call.1} parent=43 // pred_region
          %s1611 = sand.u32 %s76, 1
          %s1612 = scalar_lea.sflag [#allocation5], %s1611
          %s1613 = sand.u32 %s76, 1
          %s1614 = smul.addr %s1613, 96
          %s1615 = scalar_lea.vmem [#allocation8], %s1614
          %1616 = dma.done %s1612, 1536
        $region48: #{tpu_custom_call.1} parent=43 // pred_fallthru
          _
      $region44: #{tpu_custom_call.1} parent=5 // pred_fallthru
        _
    $region6: #{tpu_custom_call.1} parent=1 // loop_footer
      %s19 = sadd.s32 1, %s15
    $region7: #{tpu_custom_call.1} parent=1 // loop_footer_branch
      %14 = sbr.rel target = $region3
    $region8: #{tpu_custom_call.1} parent=1 // loop_exit
      _
    %1617 = vsyncpa [#allocation4], 1
    %s1618 = scalar_lea.sflag [#allocation4], 1
    %1619 = vsyncpa %s1618, 1
    %1620 = vsyncpa [#allocation7], 1
    %1621 = vsyncpa [#allocation5], 1
    %s1622 = scalar_lea.sflag [#allocation5], 1
    %1623 = vsyncpa %s1622, 1

</llo_original>
